<compile_context>
chip_gen: v6e
topology: v6e:2x2x1
jax: 0.10.0
libtpu: 0.0.40
codegen_flags: <defaults>
</compile_context>

<pallas_src>
import math

import jax
import jax.numpy as jnp
import numpy as np
from jax import lax
from jax.experimental import pallas as pl
from jax.experimental.pallas import tpu as pltpu


_WINDOW_SIZE = 11
_SIGMA = 1.5


def _round_up(x, m):
    return ((x + m - 1) // m) * m


def _gaussian_1d(window_size, sigma):
    # Matches SSIM.gaussian(): exp(-(x - ws//2)^2 / (2*sigma^2)), f32, normalized.
    g = np.array(
        [math.exp(-((x - window_size // 2) ** 2) / float(2 * sigma ** 2))
         for x in range(window_size)],
        dtype=np.float32,
    )
    return g / g.sum()


def _make_ssim_kernel(g_taps, halo, h_out):
    """Fused SSIM kernel for one (plane, row-tile) grid step.

    Builds a haloed (TH + 16, W) slab per image from the main row block plus a
    16-row "next rows" block, runs the separable 11-tap Gaussian conv for the
    five windowed moments, forms the SSIM map on the (TH, W-10) slab, and
    accumulates a row-masked partial sum in an SMEM scalar.  At the plane's
    last row-tile the per-plane sum is broadcast-written to a lane-dense
    (1, 8, 128) output block.
    """
    ws = len(g_taps)

    def kernel(c_ref, x1m_ref, x1h_ref, x2m_ref, x2h_ref, out_ref, acc_ref):
        t = pl.program_id(1)
        n_t = pl.num_programs(1)

        @pl.when(t == 0)
        def _():
            acc_ref[0] = jnp.float32(0.0)

        th = x1m_ref.shape[1]          # output rows produced by this tile
        w = x1m_ref.shape[2]           # full image width (lane axis)
        w_out = w - halo

        # Haloed input slabs: main rows [t*TH, t*TH+TH) + next 16 rows.
        x1 = jnp.concatenate([x1m_ref[0], x1h_ref[0]], axis=0)
        x2 = jnp.concatenate([x2m_ref[0], x2h_ref[0]], axis=0)

        def sep_conv(q):
            # Horizontal (lane-axis) Gaussian taps -> (rows, w_out)
            h = q[:, 0:w_out] * g_taps[0]
            for k in range(1, ws):
                h = h + q[:, k:k + w_out] * g_taps[k]
            # Vertical (sublane-axis) Gaussian taps -> (th, w_out)
            v = h[0:th, :] * g_taps[0]
            for k in range(1, ws):
                v = v + h[k:k + th, :] * g_taps[k]
            return v

        mu1 = sep_conv(x1)
        mu2 = sep_conv(x2)
        e11 = sep_conv(x1 * x1)
        e22 = sep_conv(x2 * x2)
        e12 = sep_conv(x1 * x2)

        mu1_sq = mu1 * mu1
        mu2_sq = mu2 * mu2
        mu1_mu2 = mu1 * mu2
        sigma1_sq = e11 - mu1_sq
        sigma2_sq = e22 - mu2_sq
        sigma12 = e12 - mu1_mu2

        c1 = c_ref[0]
        c2 = c_ref[1]
        v1 = 2.0 * sigma12 + c2
        v2 = sigma1_sq + sigma2_sq + c2
        ssim_map = (2.0 * mu1_mu2 + c1) * v1 / ((mu1_sq + mu2_sq + c1) * v2)

        # Mask rows past the valid output height (last tile / clamped halo).
        row = lax.broadcasted_iota(jnp.int32, ssim_map.shape, 0)
        valid = (row + t * th) < h_out
        acc_ref[0] += jnp.sum(jnp.where(valid, ssim_map, 0.0))

        @pl.when(t == n_t - 1)
        def _():
            out_ref[...] = jnp.full(out_ref.shape, acc_ref[0], jnp.float32)

    return kernel


def ssim_pallas(img1, img2, *, window_size=_WINDOW_SIZE, sigma=_SIGMA, block_rows=None):
    """SSIM.forward(img1, img2) with size_average=True, val_range=None."""
    img1 = jnp.asarray(img1, jnp.float32)
    img2 = jnp.asarray(img2, jnp.float32)
    n, c, h, w = img1.shape
    assert img2.shape == img1.shape
    halo = window_size - 1
    assert h >= window_size and w >= window_size, "image smaller than SSIM window"

    b = n * c                         # depthwise conv => planes are independent
    h_out, w_out = h - halo, w - halo
    x1 = img1.reshape(b, h, w)
    x2 = img2.reshape(b, h, w)

    # Dynamic range L (faithful to the module's data-dependent branches).
    # TODO(synk): this one-line global max/min reduction stays in XLA; folding it
    # into an extra Pallas pass would add a second kernel for negligible gain.
    max_val = jnp.where(jnp.max(img1) > 128.0, 255.0, 1.0)
    min_val = jnp.where(jnp.min(img1) < -0.5, -1.0, 0.0)
    big_l = max_val - min_val
    c12 = jnp.stack([(0.01 * big_l) ** 2, (0.03 * big_l) ** 2]).astype(jnp.float32)

    g = _gaussian_1d(window_size, sigma)            # compile-time constant taps

    halo_blk = _round_up(halo, 8)                   # 16 rows for the 11-tap window
    if block_rows is None:
        th = 128
        # Keep the ~14 live (th+16, W) f32 slabs comfortably inside VMEM.
        while th > halo_blk and (th + halo_blk) * w * 4 * 14 > 24 * 1024 * 1024:
            th //= 2
    else:
        th = block_rows
    th = max(halo_blk, _round_up(min(th, _round_up(h_out, halo_blk)), halo_blk))
    n_t = pl.cdiv(h_out, th)

    blocks_per_tile = th // halo_blk
    last_halo_block = pl.cdiv(h, halo_blk) - 1

    def main_map(bi, ti):
        return (bi, ti, 0)

    def halo_map(bi, ti):
        return (bi, jnp.minimum((ti + 1) * blocks_per_tile, last_halo_block), 0)

    kernel = _make_ssim_kernel([float(v) for v in g], halo, h_out)

    partial_sums = pl.pallas_call(
        kernel,
        grid=(b, n_t),
        out_shape=jax.ShapeDtypeStruct((b, 8, 128), jnp.float32),
        in_specs=[
            pl.BlockSpec(memory_space=pltpu.SMEM),          # [C1, C2] scalars
            pl.BlockSpec((1, th, w), main_map),             # img1 main rows
            pl.BlockSpec((1, halo_blk, w), halo_map),       # img1 halo rows
            pl.BlockSpec((1, th, w), main_map),             # img2 main rows
            pl.BlockSpec((1, halo_blk, w), halo_map),       # img2 halo rows
        ],
        out_specs=pl.BlockSpec((1, 8, 128), lambda bi, ti: (bi, 0, 0)),
        scratch_shapes=[pltpu.SMEM((1,), jnp.float32)],
        compiler_params=pltpu.CompilerParams(
            dimension_semantics=("parallel", "arbitrary"),
            vmem_limit_bytes=64 * 1024 * 1024,
        ),
    )(c12, x1, x1, x2, x2)

    return jnp.sum(partial_sums[:, 0, 0]) / float(b * h_out * w_out)


# ---------------------------------------------------------------------------
# Pure-JAX reference mirroring the PyTorch SSIM module exactly (2-D window,
# grouped VALID conv, global mean).
# ---------------------------------------------------------------------------
def ssim_ref(img1, img2, window_size=_WINDOW_SIZE, sigma=_SIGMA):
    img1 = jnp.asarray(img1, jnp.float32)
    img2 = jnp.asarray(img2, jnp.float32)
    n, c, h, w = img1.shape
    g = _gaussian_1d(window_size, sigma)
    w2d = np.outer(g, g).astype(np.float32)
    window = jnp.asarray(np.tile(w2d[None, None], (c, 1, 1, 1)))

    max_val = jnp.where(jnp.max(img1) > 128.0, 255.0, 1.0)
    min_val = jnp.where(jnp.min(img1) < -0.5, -1.0, 0.0)
    big_l = max_val - min_val
    c1 = (0.01 * big_l) ** 2
    c2 = (0.03 * big_l) ** 2

    def conv(x):
        return lax.conv_general_dilated(
            x, window, (1, 1), "VALID",
            dimension_numbers=("NCHW", "OIHW", "NCHW"),
            feature_group_count=c,
            precision=lax.Precision.HIGHEST,
        )

    mu1 = conv(img1)
    mu2 = conv(img2)
    mu1_sq = mu1 * mu1
    mu2_sq = mu2 * mu2
    mu1_mu2 = mu1 * mu2
    sigma1_sq = conv(img1 * img1) - mu1_sq
    sigma2_sq = conv(img2 * img2) - mu2_sq
    sigma12 = conv(img1 * img2) - mu1_mu2
    v1 = 2.0 * sigma12 + c2
    v2 = sigma1_sq + sigma2_sq + c2
    ssim_map = (2.0 * mu1_mu2 + c1) * v1 / ((mu1_sq + mu2_sq + c1) * v2)
    return ssim_map.mean()


if __name__ == "__main__":
    key = jax.random.PRNGKey(0)
    k1, k2 = jax.random.split(key)
    shape = (2, 3, 32, 32)            # N, C, H, W  (H, W >= window_size=11)
    img1 = jax.random.uniform(k1, shape, dtype=jnp.float32)
    img2 = jax.random.uniform(k2, shape, dtype=jnp.float32)

    # block_rows=16 exercises the multi-row-tile + halo + row-mask path.
    out = jax.block_until_ready(ssim_pallas(img1, img2, block_rows=16))
    ref = jax.block_until_ready(ssim_ref(img1, img2))

    out_np, ref_np = np.asarray(out), np.asarray(ref)
    assert np.isfinite(out_np), "non-finite SSIM"
    assert np.allclose(out_np, ref_np, rtol=2e-4, atol=2e-4), (out_np, ref_np)
    print("KERNEL_OK")
</pallas_src>

<mosaic_0001>
module attributes {stable_mosaic.version = 11 : i64} {
  func.func @kernel(%arg0: i32, %arg1: i32, %arg2: memref<2xf32, #tpu.memory_space<smem>>, %arg3: memref<1x16x32xf32, #tpu.memory_space<vmem>>, %arg4: memref<1x16x32xf32, #tpu.memory_space<vmem>>, %arg5: memref<1x16x32xf32, #tpu.memory_space<vmem>>, %arg6: memref<1x16x32xf32, #tpu.memory_space<vmem>>, %arg7: memref<1x8x128xf32, #tpu.memory_space<vmem>>, %arg8: memref<1xf32, #tpu.memory_space<smem>>) attributes {dimension_semantics = [#tpu.dimension_semantics<parallel>, #tpu.dimension_semantics<arbitrary>], iteration_bounds = array<i64: 6, 2>, scalar_prefetch = 0 : i64, scratch_operands = 1 : i64, tpu.core_type = #tpu.core_type<tc>, window_params = [{transform_indices = @transform_0, window_bounds = array<i64: 2>}, {transform_indices = @transform_1, window_bounds = array<i64: 1, 16, 32>}, {transform_indices = @transform_2, window_bounds = array<i64: 1, 16, 32>}, {transform_indices = @transform_3, window_bounds = array<i64: 1, 16, 32>}, {transform_indices = @transform_4, window_bounds = array<i64: 1, 16, 32>}, {transform_indices = @transform_5, window_bounds = array<i64: 1, 8, 128>}]} {
    %c0_i32 = arith.constant 0 : i32
    %0 = arith.cmpi eq, %arg1, %c0_i32 : i32
    %1 = arith.extui %0 : i1 to i32
    %c0_i32_0 = arith.constant 0 : i32
    %2 = arith.cmpi ne, %1, %c0_i32_0 : i32
    scf.if %2 {
      %cst_129 = arith.constant 0.000000e+00 : f32
      %c0_130 = arith.constant 0 : index
      %489 = memref.load %arg8[%c0_130] : memref<1xf32, #tpu.memory_space<smem>>
      memref.store %cst_129, %arg8[%c0_130] : memref<1xf32, #tpu.memory_space<smem>>
    } else {
    }
    %c0 = arith.constant 0 : index
    %c0_1 = arith.constant 0 : index
    %c0_2 = arith.constant 0 : index
    %3 = vector.load %arg3[%c0, %c0_1, %c0_2] : memref<1x16x32xf32, #tpu.memory_space<vmem>>, vector<1x16x32xf32>
    %4 = vector.shape_cast %3 : vector<1x16x32xf32> to vector<16x32xf32>
    %c0_3 = arith.constant 0 : index
    %c0_4 = arith.constant 0 : index
    %c0_5 = arith.constant 0 : index
    %5 = vector.load %arg4[%c0_3, %c0_4, %c0_5] : memref<1x16x32xf32, #tpu.memory_space<vmem>>, vector<1x16x32xf32>
    %6 = vector.shape_cast %5 : vector<1x16x32xf32> to vector<16x32xf32>
    %7 = tpu.concatenate %4, %6 in 0 : vector<16x32xf32>, vector<16x32xf32> -> vector<32x32xf32>
    %c0_6 = arith.constant 0 : index
    %c0_7 = arith.constant 0 : index
    %c0_8 = arith.constant 0 : index
    %8 = vector.load %arg5[%c0_6, %c0_7, %c0_8] : memref<1x16x32xf32, #tpu.memory_space<vmem>>, vector<1x16x32xf32>
    %9 = vector.shape_cast %8 : vector<1x16x32xf32> to vector<16x32xf32>
    %c0_9 = arith.constant 0 : index
    %c0_10 = arith.constant 0 : index
    %c0_11 = arith.constant 0 : index
    %10 = vector.load %arg6[%c0_9, %c0_10, %c0_11] : memref<1x16x32xf32, #tpu.memory_space<vmem>>, vector<1x16x32xf32>
    %11 = vector.shape_cast %10 : vector<1x16x32xf32> to vector<16x32xf32>
    %12 = tpu.concatenate %9, %11 in 0 : vector<16x32xf32>, vector<16x32xf32> -> vector<32x32xf32>
    %13 = vector.extract_strided_slice %7 {offsets = [0, 0], sizes = [32, 22], strides = [1, 1]} : vector<32x32xf32> to vector<32x22xf32>
    %cst = arith.constant 0.00102838024 : f32
    %14 = vector.broadcast %cst : f32 to vector<32x22xf32>
    %15 = arith.mulf %13, %14 : vector<32x22xf32>
    %16 = vector.extract_strided_slice %7 {offsets = [0, 1], sizes = [32, 22], strides = [1, 1]} : vector<32x32xf32> to vector<32x22xf32>
    %cst_12 = arith.constant 0.00759875868 : f32
    %17 = vector.broadcast %cst_12 : f32 to vector<32x22xf32>
    %18 = arith.mulf %16, %17 : vector<32x22xf32>
    %19 = arith.addf %15, %18 : vector<32x22xf32>
    %20 = vector.extract_strided_slice %7 {offsets = [0, 2], sizes = [32, 22], strides = [1, 1]} : vector<32x32xf32> to vector<32x22xf32>
    %cst_13 = arith.constant 0.0360007733 : f32
    %21 = vector.broadcast %cst_13 : f32 to vector<32x22xf32>
    %22 = arith.mulf %20, %21 : vector<32x22xf32>
    %23 = arith.addf %19, %22 : vector<32x22xf32>
    %24 = vector.extract_strided_slice %7 {offsets = [0, 3], sizes = [32, 22], strides = [1, 1]} : vector<32x32xf32> to vector<32x22xf32>
    %cst_14 = arith.constant 0.109360695 : f32
    %25 = vector.broadcast %cst_14 : f32 to vector<32x22xf32>
    %26 = arith.mulf %24, %25 : vector<32x22xf32>
    %27 = arith.addf %23, %26 : vector<32x22xf32>
    %28 = vector.extract_strided_slice %7 {offsets = [0, 4], sizes = [32, 22], strides = [1, 1]} : vector<32x32xf32> to vector<32x22xf32>
    %cst_15 = arith.constant 0.213005543 : f32
    %29 = vector.broadcast %cst_15 : f32 to vector<32x22xf32>
    %30 = arith.mulf %28, %29 : vector<32x22xf32>
    %31 = arith.addf %27, %30 : vector<32x22xf32>
    %32 = vector.extract_strided_slice %7 {offsets = [0, 5], sizes = [32, 22], strides = [1, 1]} : vector<32x32xf32> to vector<32x22xf32>
    %cst_16 = arith.constant 0.266011745 : f32
    %33 = vector.broadcast %cst_16 : f32 to vector<32x22xf32>
    %34 = arith.mulf %32, %33 : vector<32x22xf32>
    %35 = arith.addf %31, %34 : vector<32x22xf32>
    %36 = vector.extract_strided_slice %7 {offsets = [0, 6], sizes = [32, 22], strides = [1, 1]} : vector<32x32xf32> to vector<32x22xf32>
    %cst_17 = arith.constant 0.213005543 : f32
    %37 = vector.broadcast %cst_17 : f32 to vector<32x22xf32>
    %38 = arith.mulf %36, %37 : vector<32x22xf32>
    %39 = arith.addf %35, %38 : vector<32x22xf32>
    %40 = vector.extract_strided_slice %7 {offsets = [0, 7], sizes = [32, 22], strides = [1, 1]} : vector<32x32xf32> to vector<32x22xf32>
    %cst_18 = arith.constant 0.109360695 : f32
    %41 = vector.broadcast %cst_18 : f32 to vector<32x22xf32>
    %42 = arith.mulf %40, %41 : vector<32x22xf32>
    %43 = arith.addf %39, %42 : vector<32x22xf32>
    %44 = vector.extract_strided_slice %7 {offsets = [0, 8], sizes = [32, 22], strides = [1, 1]} : vector<32x32xf32> to vector<32x22xf32>
    %cst_19 = arith.constant 0.0360007733 : f32
    %45 = vector.broadcast %cst_19 : f32 to vector<32x22xf32>
    %46 = arith.mulf %44, %45 : vector<32x22xf32>
    %47 = arith.addf %43, %46 : vector<32x22xf32>
    %48 = vector.extract_strided_slice %7 {offsets = [0, 9], sizes = [32, 22], strides = [1, 1]} : vector<32x32xf32> to vector<32x22xf32>
    %cst_20 = arith.constant 0.00759875868 : f32
    %49 = vector.broadcast %cst_20 : f32 to vector<32x22xf32>
    %50 = arith.mulf %48, %49 : vector<32x22xf32>
    %51 = arith.addf %47, %50 : vector<32x22xf32>
    %52 = vector.extract_strided_slice %7 {offsets = [0, 10], sizes = [32, 22], strides = [1, 1]} : vector<32x32xf32> to vector<32x22xf32>
    %cst_21 = arith.constant 0.00102838024 : f32
    %53 = vector.broadcast %cst_21 : f32 to vector<32x22xf32>
    %54 = arith.mulf %52, %53 : vector<32x22xf32>
    %55 = arith.addf %51, %54 : vector<32x22xf32>
    %56 = vector.extract_strided_slice %55 {offsets = [0, 0], sizes = [16, 22], strides = [1, 1]} : vector<32x22xf32> to vector<16x22xf32>
    %cst_22 = arith.constant 0.00102838024 : f32
    %57 = vector.broadcast %cst_22 : f32 to vector<16x22xf32>
    %58 = arith.mulf %56, %57 : vector<16x22xf32>
    %59 = vector.extract_strided_slice %55 {offsets = [1, 0], sizes = [16, 22], strides = [1, 1]} : vector<32x22xf32> to vector<16x22xf32>
    %cst_23 = arith.constant 0.00759875868 : f32
    %60 = vector.broadcast %cst_23 : f32 to vector<16x22xf32>
    %61 = arith.mulf %59, %60 : vector<16x22xf32>
    %62 = arith.addf %58, %61 : vector<16x22xf32>
    %63 = vector.extract_strided_slice %55 {offsets = [2, 0], sizes = [16, 22], strides = [1, 1]} : vector<32x22xf32> to vector<16x22xf32>
    %cst_24 = arith.constant 0.0360007733 : f32
    %64 = vector.broadcast %cst_24 : f32 to vector<16x22xf32>
    %65 = arith.mulf %63, %64 : vector<16x22xf32>
    %66 = arith.addf %62, %65 : vector<16x22xf32>
    %67 = vector.extract_strided_slice %55 {offsets = [3, 0], sizes = [16, 22], strides = [1, 1]} : vector<32x22xf32> to vector<16x22xf32>
    %cst_25 = arith.constant 0.109360695 : f32
    %68 = vector.broadcast %cst_25 : f32 to vector<16x22xf32>
    %69 = arith.mulf %67, %68 : vector<16x22xf32>
    %70 = arith.addf %66, %69 : vector<16x22xf32>
    %71 = vector.extract_strided_slice %55 {offsets = [4, 0], sizes = [16, 22], strides = [1, 1]} : vector<32x22xf32> to vector<16x22xf32>
    %cst_26 = arith.constant 0.213005543 : f32
    %72 = vector.broadcast %cst_26 : f32 to vector<16x22xf32>
    %73 = arith.mulf %71, %72 : vector<16x22xf32>
    %74 = arith.addf %70, %73 : vector<16x22xf32>
    %75 = vector.extract_strided_slice %55 {offsets = [5, 0], sizes = [16, 22], strides = [1, 1]} : vector<32x22xf32> to vector<16x22xf32>
    %cst_27 = arith.constant 0.266011745 : f32
    %76 = vector.broadcast %cst_27 : f32 to vector<16x22xf32>
    %77 = arith.mulf %75, %76 : vector<16x22xf32>
    %78 = arith.addf %74, %77 : vector<16x22xf32>
    %79 = vector.extract_strided_slice %55 {offsets = [6, 0], sizes = [16, 22], strides = [1, 1]} : vector<32x22xf32> to vector<16x22xf32>
    %cst_28 = arith.constant 0.213005543 : f32
    %80 = vector.broadcast %cst_28 : f32 to vector<16x22xf32>
    %81 = arith.mulf %79, %80 : vector<16x22xf32>
    %82 = arith.addf %78, %81 : vector<16x22xf32>
    %83 = vector.extract_strided_slice %55 {offsets = [7, 0], sizes = [16, 22], strides = [1, 1]} : vector<32x22xf32> to vector<16x22xf32>
    %cst_29 = arith.constant 0.109360695 : f32
    %84 = vector.broadcast %cst_29 : f32 to vector<16x22xf32>
    %85 = arith.mulf %83, %84 : vector<16x22xf32>
    %86 = arith.addf %82, %85 : vector<16x22xf32>
    %87 = vector.extract_strided_slice %55 {offsets = [8, 0], sizes = [16, 22], strides = [1, 1]} : vector<32x22xf32> to vector<16x22xf32>
    %cst_30 = arith.constant 0.0360007733 : f32
    %88 = vector.broadcast %cst_30 : f32 to vector<16x22xf32>
    %89 = arith.mulf %87, %88 : vector<16x22xf32>
    %90 = arith.addf %86, %89 : vector<16x22xf32>
    %91 = vector.extract_strided_slice %55 {offsets = [9, 0], sizes = [16, 22], strides = [1, 1]} : vector<32x22xf32> to vector<16x22xf32>
    %cst_31 = arith.constant 0.00759875868 : f32
    %92 = vector.broadcast %cst_31 : f32 to vector<16x22xf32>
    %93 = arith.mulf %91, %92 : vector<16x22xf32>
    %94 = arith.addf %90, %93 : vector<16x22xf32>
    %95 = vector.extract_strided_slice %55 {offsets = [10, 0], sizes = [16, 22], strides = [1, 1]} : vector<32x22xf32> to vector<16x22xf32>
    %cst_32 = arith.constant 0.00102838024 : f32
    %96 = vector.broadcast %cst_32 : f32 to vector<16x22xf32>
    %97 = arith.mulf %95, %96 : vector<16x22xf32>
    %98 = arith.addf %94, %97 : vector<16x22xf32>
    %99 = vector.extract_strided_slice %12 {offsets = [0, 0], sizes = [32, 22], strides = [1, 1]} : vector<32x32xf32> to vector<32x22xf32>
    %cst_33 = arith.constant 0.00102838024 : f32
    %100 = vector.broadcast %cst_33 : f32 to vector<32x22xf32>
    %101 = arith.mulf %99, %100 : vector<32x22xf32>
    %102 = vector.extract_strided_slice %12 {offsets = [0, 1], sizes = [32, 22], strides = [1, 1]} : vector<32x32xf32> to vector<32x22xf32>
    %cst_34 = arith.constant 0.00759875868 : f32
    %103 = vector.broadcast %cst_34 : f32 to vector<32x22xf32>
    %104 = arith.mulf %102, %103 : vector<32x22xf32>
    %105 = arith.addf %101, %104 : vector<32x22xf32>
    %106 = vector.extract_strided_slice %12 {offsets = [0, 2], sizes = [32, 22], strides = [1, 1]} : vector<32x32xf32> to vector<32x22xf32>
    %cst_35 = arith.constant 0.0360007733 : f32
    %107 = vector.broadcast %cst_35 : f32 to vector<32x22xf32>
    %108 = arith.mulf %106, %107 : vector<32x22xf32>
    %109 = arith.addf %105, %108 : vector<32x22xf32>
    %110 = vector.extract_strided_slice %12 {offsets = [0, 3], sizes = [32, 22], strides = [1, 1]} : vector<32x32xf32> to vector<32x22xf32>
    %cst_36 = arith.constant 0.109360695 : f32
    %111 = vector.broadcast %cst_36 : f32 to vector<32x22xf32>
    %112 = arith.mulf %110, %111 : vector<32x22xf32>
    %113 = arith.addf %109, %112 : vector<32x22xf32>
    %114 = vector.extract_strided_slice %12 {offsets = [0, 4], sizes = [32, 22], strides = [1, 1]} : vector<32x32xf32> to vector<32x22xf32>
    %cst_37 = arith.constant 0.213005543 : f32
    %115 = vector.broadcast %cst_37 : f32 to vector<32x22xf32>
    %116 = arith.mulf %114, %115 : vector<32x22xf32>
    %117 = arith.addf %113, %116 : vector<32x22xf32>
    %118 = vector.extract_strided_slice %12 {offsets = [0, 5], sizes = [32, 22], strides = [1, 1]} : vector<32x32xf32> to vector<32x22xf32>
    %cst_38 = arith.constant 0.266011745 : f32
    %119 = vector.broadcast %cst_38 : f32 to vector<32x22xf32>
    %120 = arith.mulf %118, %119 : vector<32x22xf32>
    %121 = arith.addf %117, %120 : vector<32x22xf32>
    %122 = vector.extract_strided_slice %12 {offsets = [0, 6], sizes = [32, 22], strides = [1, 1]} : vector<32x32xf32> to vector<32x22xf32>
    %cst_39 = arith.constant 0.213005543 : f32
    %123 = vector.broadcast %cst_39 : f32 to vector<32x22xf32>
    %124 = arith.mulf %122, %123 : vector<32x22xf32>
    %125 = arith.addf %121, %124 : vector<32x22xf32>
    %126 = vector.extract_strided_slice %12 {offsets = [0, 7], sizes = [32, 22], strides = [1, 1]} : vector<32x32xf32> to vector<32x22xf32>
    %cst_40 = arith.constant 0.109360695 : f32
    %127 = vector.broadcast %cst_40 : f32 to vector<32x22xf32>
    %128 = arith.mulf %126, %127 : vector<32x22xf32>
    %129 = arith.addf %125, %128 : vector<32x22xf32>
    %130 = vector.extract_strided_slice %12 {offsets = [0, 8], sizes = [32, 22], strides = [1, 1]} : vector<32x32xf32> to vector<32x22xf32>
    %cst_41 = arith.constant 0.0360007733 : f32
    %131 = vector.broadcast %cst_41 : f32 to vector<32x22xf32>
    %132 = arith.mulf %130, %131 : vector<32x22xf32>
    %133 = arith.addf %129, %132 : vector<32x22xf32>
    %134 = vector.extract_strided_slice %12 {offsets = [0, 9], sizes = [32, 22], strides = [1, 1]} : vector<32x32xf32> to vector<32x22xf32>
    %cst_42 = arith.constant 0.00759875868 : f32
    %135 = vector.broadcast %cst_42 : f32 to vector<32x22xf32>
    %136 = arith.mulf %134, %135 : vector<32x22xf32>
    %137 = arith.addf %133, %136 : vector<32x22xf32>
    %138 = vector.extract_strided_slice %12 {offsets = [0, 10], sizes = [32, 22], strides = [1, 1]} : vector<32x32xf32> to vector<32x22xf32>
    %cst_43 = arith.constant 0.00102838024 : f32
    %139 = vector.broadcast %cst_43 : f32 to vector<32x22xf32>
    %140 = arith.mulf %138, %139 : vector<32x22xf32>
    %141 = arith.addf %137, %140 : vector<32x22xf32>
    %142 = vector.extract_strided_slice %141 {offsets = [0, 0], sizes = [16, 22], strides = [1, 1]} : vector<32x22xf32> to vector<16x22xf32>
    %cst_44 = arith.constant 0.00102838024 : f32
    %143 = vector.broadcast %cst_44 : f32 to vector<16x22xf32>
    %144 = arith.mulf %142, %143 : vector<16x22xf32>
    %145 = vector.extract_strided_slice %141 {offsets = [1, 0], sizes = [16, 22], strides = [1, 1]} : vector<32x22xf32> to vector<16x22xf32>
    %cst_45 = arith.constant 0.00759875868 : f32
    %146 = vector.broadcast %cst_45 : f32 to vector<16x22xf32>
    %147 = arith.mulf %145, %146 : vector<16x22xf32>
    %148 = arith.addf %144, %147 : vector<16x22xf32>
    %149 = vector.extract_strided_slice %141 {offsets = [2, 0], sizes = [16, 22], strides = [1, 1]} : vector<32x22xf32> to vector<16x22xf32>
    %cst_46 = arith.constant 0.0360007733 : f32
    %150 = vector.broadcast %cst_46 : f32 to vector<16x22xf32>
    %151 = arith.mulf %149, %150 : vector<16x22xf32>
    %152 = arith.addf %148, %151 : vector<16x22xf32>
    %153 = vector.extract_strided_slice %141 {offsets = [3, 0], sizes = [16, 22], strides = [1, 1]} : vector<32x22xf32> to vector<16x22xf32>
    %cst_47 = arith.constant 0.109360695 : f32
    %154 = vector.broadcast %cst_47 : f32 to vector<16x22xf32>
    %155 = arith.mulf %153, %154 : vector<16x22xf32>
    %156 = arith.addf %152, %155 : vector<16x22xf32>
    %157 = vector.extract_strided_slice %141 {offsets = [4, 0], sizes = [16, 22], strides = [1, 1]} : vector<32x22xf32> to vector<16x22xf32>
    %cst_48 = arith.constant 0.213005543 : f32
    %158 = vector.broadcast %cst_48 : f32 to vector<16x22xf32>
    %159 = arith.mulf %157, %158 : vector<16x22xf32>
    %160 = arith.addf %156, %159 : vector<16x22xf32>
    %161 = vector.extract_strided_slice %141 {offsets = [5, 0], sizes = [16, 22], strides = [1, 1]} : vector<32x22xf32> to vector<16x22xf32>
    %cst_49 = arith.constant 0.266011745 : f32
    %162 = vector.broadcast %cst_49 : f32 to vector<16x22xf32>
    %163 = arith.mulf %161, %162 : vector<16x22xf32>
    %164 = arith.addf %160, %163 : vector<16x22xf32>
    %165 = vector.extract_strided_slice %141 {offsets = [6, 0], sizes = [16, 22], strides = [1, 1]} : vector<32x22xf32> to vector<16x22xf32>
    %cst_50 = arith.constant 0.213005543 : f32
    %166 = vector.broadcast %cst_50 : f32 to vector<16x22xf32>
    %167 = arith.mulf %165, %166 : vector<16x22xf32>
    %168 = arith.addf %164, %167 : vector<16x22xf32>
    %169 = vector.extract_strided_slice %141 {offsets = [7, 0], sizes = [16, 22], strides = [1, 1]} : vector<32x22xf32> to vector<16x22xf32>
    %cst_51 = arith.constant 0.109360695 : f32
    %170 = vector.broadcast %cst_51 : f32 to vector<16x22xf32>
    %171 = arith.mulf %169, %170 : vector<16x22xf32>
    %172 = arith.addf %168, %171 : vector<16x22xf32>
    %173 = vector.extract_strided_slice %141 {offsets = [8, 0], sizes = [16, 22], strides = [1, 1]} : vector<32x22xf32> to vector<16x22xf32>
    %cst_52 = arith.constant 0.0360007733 : f32
    %174 = vector.broadcast %cst_52 : f32 to vector<16x22xf32>
    %175 = arith.mulf %173, %174 : vector<16x22xf32>
    %176 = arith.addf %172, %175 : vector<16x22xf32>
    %177 = vector.extract_strided_slice %141 {offsets = [9, 0], sizes = [16, 22], strides = [1, 1]} : vector<32x22xf32> to vector<16x22xf32>
    %cst_53 = arith.constant 0.00759875868 : f32
    %178 = vector.broadcast %cst_53 : f32 to vector<16x22xf32>
    %179 = arith.mulf %177, %178 : vector<16x22xf32>
    %180 = arith.addf %176, %179 : vector<16x22xf32>
    %181 = vector.extract_strided_slice %141 {offsets = [10, 0], sizes = [16, 22], strides = [1, 1]} : vector<32x22xf32> to vector<16x22xf32>
    %cst_54 = arith.constant 0.00102838024 : f32
    %182 = vector.broadcast %cst_54 : f32 to vector<16x22xf32>
    %183 = arith.mulf %181, %182 : vector<16x22xf32>
    %184 = arith.addf %180, %183 : vector<16x22xf32>
    %185 = arith.mulf %7, %7 : vector<32x32xf32>
    %186 = vector.extract_strided_slice %185 {offsets = [0, 0], sizes = [32, 22], strides = [1, 1]} : vector<32x32xf32> to vector<32x22xf32>
    %cst_55 = arith.constant 0.00102838024 : f32
    %187 = vector.broadcast %cst_55 : f32 to vector<32x22xf32>
    %188 = arith.mulf %186, %187 : vector<32x22xf32>
    %189 = vector.extract_strided_slice %185 {offsets = [0, 1], sizes = [32, 22], strides = [1, 1]} : vector<32x32xf32> to vector<32x22xf32>
    %cst_56 = arith.constant 0.00759875868 : f32
    %190 = vector.broadcast %cst_56 : f32 to vector<32x22xf32>
    %191 = arith.mulf %189, %190 : vector<32x22xf32>
    %192 = arith.addf %188, %191 : vector<32x22xf32>
    %193 = vector.extract_strided_slice %185 {offsets = [0, 2], sizes = [32, 22], strides = [1, 1]} : vector<32x32xf32> to vector<32x22xf32>
    %cst_57 = arith.constant 0.0360007733 : f32
    %194 = vector.broadcast %cst_57 : f32 to vector<32x22xf32>
    %195 = arith.mulf %193, %194 : vector<32x22xf32>
    %196 = arith.addf %192, %195 : vector<32x22xf32>
    %197 = vector.extract_strided_slice %185 {offsets = [0, 3], sizes = [32, 22], strides = [1, 1]} : vector<32x32xf32> to vector<32x22xf32>
    %cst_58 = arith.constant 0.109360695 : f32
    %198 = vector.broadcast %cst_58 : f32 to vector<32x22xf32>
    %199 = arith.mulf %197, %198 : vector<32x22xf32>
    %200 = arith.addf %196, %199 : vector<32x22xf32>
    %201 = vector.extract_strided_slice %185 {offsets = [0, 4], sizes = [32, 22], strides = [1, 1]} : vector<32x32xf32> to vector<32x22xf32>
    %cst_59 = arith.constant 0.213005543 : f32
    %202 = vector.broadcast %cst_59 : f32 to vector<32x22xf32>
    %203 = arith.mulf %201, %202 : vector<32x22xf32>
    %204 = arith.addf %200, %203 : vector<32x22xf32>
    %205 = vector.extract_strided_slice %185 {offsets = [0, 5], sizes = [32, 22], strides = [1, 1]} : vector<32x32xf32> to vector<32x22xf32>
    %cst_60 = arith.constant 0.266011745 : f32
    %206 = vector.broadcast %cst_60 : f32 to vector<32x22xf32>
    %207 = arith.mulf %205, %206 : vector<32x22xf32>
    %208 = arith.addf %204, %207 : vector<32x22xf32>
    %209 = vector.extract_strided_slice %185 {offsets = [0, 6], sizes = [32, 22], strides = [1, 1]} : vector<32x32xf32> to vector<32x22xf32>
    %cst_61 = arith.constant 0.213005543 : f32
    %210 = vector.broadcast %cst_61 : f32 to vector<32x22xf32>
    %211 = arith.mulf %209, %210 : vector<32x22xf32>
    %212 = arith.addf %208, %211 : vector<32x22xf32>
    %213 = vector.extract_strided_slice %185 {offsets = [0, 7], sizes = [32, 22], strides = [1, 1]} : vector<32x32xf32> to vector<32x22xf32>
    %cst_62 = arith.constant 0.109360695 : f32
    %214 = vector.broadcast %cst_62 : f32 to vector<32x22xf32>
    %215 = arith.mulf %213, %214 : vector<32x22xf32>
    %216 = arith.addf %212, %215 : vector<32x22xf32>
    %217 = vector.extract_strided_slice %185 {offsets = [0, 8], sizes = [32, 22], strides = [1, 1]} : vector<32x32xf32> to vector<32x22xf32>
    %cst_63 = arith.constant 0.0360007733 : f32
    %218 = vector.broadcast %cst_63 : f32 to vector<32x22xf32>
    %219 = arith.mulf %217, %218 : vector<32x22xf32>
    %220 = arith.addf %216, %219 : vector<32x22xf32>
    %221 = vector.extract_strided_slice %185 {offsets = [0, 9], sizes = [32, 22], strides = [1, 1]} : vector<32x32xf32> to vector<32x22xf32>
    %cst_64 = arith.constant 0.00759875868 : f32
    %222 = vector.broadcast %cst_64 : f32 to vector<32x22xf32>
    %223 = arith.mulf %221, %222 : vector<32x22xf32>
    %224 = arith.addf %220, %223 : vector<32x22xf32>
    %225 = vector.extract_strided_slice %185 {offsets = [0, 10], sizes = [32, 22], strides = [1, 1]} : vector<32x32xf32> to vector<32x22xf32>
    %cst_65 = arith.constant 0.00102838024 : f32
    %226 = vector.broadcast %cst_65 : f32 to vector<32x22xf32>
    %227 = arith.mulf %225, %226 : vector<32x22xf32>
    %228 = arith.addf %224, %227 : vector<32x22xf32>
    %229 = vector.extract_strided_slice %228 {offsets = [0, 0], sizes = [16, 22], strides = [1, 1]} : vector<32x22xf32> to vector<16x22xf32>
    %cst_66 = arith.constant 0.00102838024 : f32
    %230 = vector.broadcast %cst_66 : f32 to vector<16x22xf32>
    %231 = arith.mulf %229, %230 : vector<16x22xf32>
    %232 = vector.extract_strided_slice %228 {offsets = [1, 0], sizes = [16, 22], strides = [1, 1]} : vector<32x22xf32> to vector<16x22xf32>
    %cst_67 = arith.constant 0.00759875868 : f32
    %233 = vector.broadcast %cst_67 : f32 to vector<16x22xf32>
    %234 = arith.mulf %232, %233 : vector<16x22xf32>
    %235 = arith.addf %231, %234 : vector<16x22xf32>
    %236 = vector.extract_strided_slice %228 {offsets = [2, 0], sizes = [16, 22], strides = [1, 1]} : vector<32x22xf32> to vector<16x22xf32>
    %cst_68 = arith.constant 0.0360007733 : f32
    %237 = vector.broadcast %cst_68 : f32 to vector<16x22xf32>
    %238 = arith.mulf %236, %237 : vector<16x22xf32>
    %239 = arith.addf %235, %238 : vector<16x22xf32>
    %240 = vector.extract_strided_slice %228 {offsets = [3, 0], sizes = [16, 22], strides = [1, 1]} : vector<32x22xf32> to vector<16x22xf32>
    %cst_69 = arith.constant 0.109360695 : f32
    %241 = vector.broadcast %cst_69 : f32 to vector<16x22xf32>
    %242 = arith.mulf %240, %241 : vector<16x22xf32>
    %243 = arith.addf %239, %242 : vector<16x22xf32>
    %244 = vector.extract_strided_slice %228 {offsets = [4, 0], sizes = [16, 22], strides = [1, 1]} : vector<32x22xf32> to vector<16x22xf32>
    %cst_70 = arith.constant 0.213005543 : f32
    %245 = vector.broadcast %cst_70 : f32 to vector<16x22xf32>
    %246 = arith.mulf %244, %245 : vector<16x22xf32>
    %247 = arith.addf %243, %246 : vector<16x22xf32>
    %248 = vector.extract_strided_slice %228 {offsets = [5, 0], sizes = [16, 22], strides = [1, 1]} : vector<32x22xf32> to vector<16x22xf32>
    %cst_71 = arith.constant 0.266011745 : f32
    %249 = vector.broadcast %cst_71 : f32 to vector<16x22xf32>
    %250 = arith.mulf %248, %249 : vector<16x22xf32>
    %251 = arith.addf %247, %250 : vector<16x22xf32>
    %252 = vector.extract_strided_slice %228 {offsets = [6, 0], sizes = [16, 22], strides = [1, 1]} : vector<32x22xf32> to vector<16x22xf32>
    %cst_72 = arith.constant 0.213005543 : f32
    %253 = vector.broadcast %cst_72 : f32 to vector<16x22xf32>
    %254 = arith.mulf %252, %253 : vector<16x22xf32>
    %255 = arith.addf %251, %254 : vector<16x22xf32>
    %256 = vector.extract_strided_slice %228 {offsets = [7, 0], sizes = [16, 22], strides = [1, 1]} : vector<32x22xf32> to vector<16x22xf32>
    %cst_73 = arith.constant 0.109360695 : f32
    %257 = vector.broadcast %cst_73 : f32 to vector<16x22xf32>
    %258 = arith.mulf %256, %257 : vector<16x22xf32>
    %259 = arith.addf %255, %258 : vector<16x22xf32>
    %260 = vector.extract_strided_slice %228 {offsets = [8, 0], sizes = [16, 22], strides = [1, 1]} : vector<32x22xf32> to vector<16x22xf32>
    %cst_74 = arith.constant 0.0360007733 : f32
    %261 = vector.broadcast %cst_74 : f32 to vector<16x22xf32>
    %262 = arith.mulf %260, %261 : vector<16x22xf32>
    %263 = arith.addf %259, %262 : vector<16x22xf32>
    %264 = vector.extract_strided_slice %228 {offsets = [9, 0], sizes = [16, 22], strides = [1, 1]} : vector<32x22xf32> to vector<16x22xf32>
    %cst_75 = arith.constant 0.00759875868 : f32
    %265 = vector.broadcast %cst_75 : f32 to vector<16x22xf32>
    %266 = arith.mulf %264, %265 : vector<16x22xf32>
    %267 = arith.addf %263, %266 : vector<16x22xf32>
    %268 = vector.extract_strided_slice %228 {offsets = [10, 0], sizes = [16, 22], strides = [1, 1]} : vector<32x22xf32> to vector<16x22xf32>
    %cst_76 = arith.constant 0.00102838024 : f32
    %269 = vector.broadcast %cst_76 : f32 to vector<16x22xf32>
    %270 = arith.mulf %268, %269 : vector<16x22xf32>
    %271 = arith.addf %267, %270 : vector<16x22xf32>
    %272 = arith.mulf %12, %12 : vector<32x32xf32>
    %273 = vector.extract_strided_slice %272 {offsets = [0, 0], sizes = [32, 22], strides = [1, 1]} : vector<32x32xf32> to vector<32x22xf32>
    %cst_77 = arith.constant 0.00102838024 : f32
    %274 = vector.broadcast %cst_77 : f32 to vector<32x22xf32>
    %275 = arith.mulf %273, %274 : vector<32x22xf32>
    %276 = vector.extract_strided_slice %272 {offsets = [0, 1], sizes = [32, 22], strides = [1, 1]} : vector<32x32xf32> to vector<32x22xf32>
    %cst_78 = arith.constant 0.00759875868 : f32
    %277 = vector.broadcast %cst_78 : f32 to vector<32x22xf32>
    %278 = arith.mulf %276, %277 : vector<32x22xf32>
    %279 = arith.addf %275, %278 : vector<32x22xf32>
    %280 = vector.extract_strided_slice %272 {offsets = [0, 2], sizes = [32, 22], strides = [1, 1]} : vector<32x32xf32> to vector<32x22xf32>
    %cst_79 = arith.constant 0.0360007733 : f32
    %281 = vector.broadcast %cst_79 : f32 to vector<32x22xf32>
    %282 = arith.mulf %280, %281 : vector<32x22xf32>
    %283 = arith.addf %279, %282 : vector<32x22xf32>
    %284 = vector.extract_strided_slice %272 {offsets = [0, 3], sizes = [32, 22], strides = [1, 1]} : vector<32x32xf32> to vector<32x22xf32>
    %cst_80 = arith.constant 0.109360695 : f32
    %285 = vector.broadcast %cst_80 : f32 to vector<32x22xf32>
    %286 = arith.mulf %284, %285 : vector<32x22xf32>
    %287 = arith.addf %283, %286 : vector<32x22xf32>
    %288 = vector.extract_strided_slice %272 {offsets = [0, 4], sizes = [32, 22], strides = [1, 1]} : vector<32x32xf32> to vector<32x22xf32>
    %cst_81 = arith.constant 0.213005543 : f32
    %289 = vector.broadcast %cst_81 : f32 to vector<32x22xf32>
    %290 = arith.mulf %288, %289 : vector<32x22xf32>
    %291 = arith.addf %287, %290 : vector<32x22xf32>
    %292 = vector.extract_strided_slice %272 {offsets = [0, 5], sizes = [32, 22], strides = [1, 1]} : vector<32x32xf32> to vector<32x22xf32>
    %cst_82 = arith.constant 0.266011745 : f32
    %293 = vector.broadcast %cst_82 : f32 to vector<32x22xf32>
    %294 = arith.mulf %292, %293 : vector<32x22xf32>
    %295 = arith.addf %291, %294 : vector<32x22xf32>
    %296 = vector.extract_strided_slice %272 {offsets = [0, 6], sizes = [32, 22], strides = [1, 1]} : vector<32x32xf32> to vector<32x22xf32>
    %cst_83 = arith.constant 0.213005543 : f32
    %297 = vector.broadcast %cst_83 : f32 to vector<32x22xf32>
    %298 = arith.mulf %296, %297 : vector<32x22xf32>
    %299 = arith.addf %295, %298 : vector<32x22xf32>
    %300 = vector.extract_strided_slice %272 {offsets = [0, 7], sizes = [32, 22], strides = [1, 1]} : vector<32x32xf32> to vector<32x22xf32>
    %cst_84 = arith.constant 0.109360695 : f32
    %301 = vector.broadcast %cst_84 : f32 to vector<32x22xf32>
    %302 = arith.mulf %300, %301 : vector<32x22xf32>
    %303 = arith.addf %299, %302 : vector<32x22xf32>
    %304 = vector.extract_strided_slice %272 {offsets = [0, 8], sizes = [32, 22], strides = [1, 1]} : vector<32x32xf32> to vector<32x22xf32>
    %cst_85 = arith.constant 0.0360007733 : f32
    %305 = vector.broadcast %cst_85 : f32 to vector<32x22xf32>
    %306 = arith.mulf %304, %305 : vector<32x22xf32>
    %307 = arith.addf %303, %306 : vector<32x22xf32>
    %308 = vector.extract_strided_slice %272 {offsets = [0, 9], sizes = [32, 22], strides = [1, 1]} : vector<32x32xf32> to vector<32x22xf32>
    %cst_86 = arith.constant 0.00759875868 : f32
    %309 = vector.broadcast %cst_86 : f32 to vector<32x22xf32>
    %310 = arith.mulf %308, %309 : vector<32x22xf32>
    %311 = arith.addf %307, %310 : vector<32x22xf32>
    %312 = vector.extract_strided_slice %272 {offsets = [0, 10], sizes = [32, 22], strides = [1, 1]} : vector<32x32xf32> to vector<32x22xf32>
    %cst_87 = arith.constant 0.00102838024 : f32
    %313 = vector.broadcast %cst_87 : f32 to vector<32x22xf32>
    %314 = arith.mulf %312, %313 : vector<32x22xf32>
    %315 = arith.addf %311, %314 : vector<32x22xf32>
    %316 = vector.extract_strided_slice %315 {offsets = [0, 0], sizes = [16, 22], strides = [1, 1]} : vector<32x22xf32> to vector<16x22xf32>
    %cst_88 = arith.constant 0.00102838024 : f32
    %317 = vector.broadcast %cst_88 : f32 to vector<16x22xf32>
    %318 = arith.mulf %316, %317 : vector<16x22xf32>
    %319 = vector.extract_strided_slice %315 {offsets = [1, 0], sizes = [16, 22], strides = [1, 1]} : vector<32x22xf32> to vector<16x22xf32>
    %cst_89 = arith.constant 0.00759875868 : f32
    %320 = vector.broadcast %cst_89 : f32 to vector<16x22xf32>
    %321 = arith.mulf %319, %320 : vector<16x22xf32>
    %322 = arith.addf %318, %321 : vector<16x22xf32>
    %323 = vector.extract_strided_slice %315 {offsets = [2, 0], sizes = [16, 22], strides = [1, 1]} : vector<32x22xf32> to vector<16x22xf32>
    %cst_90 = arith.constant 0.0360007733 : f32
    %324 = vector.broadcast %cst_90 : f32 to vector<16x22xf32>
    %325 = arith.mulf %323, %324 : vector<16x22xf32>
    %326 = arith.addf %322, %325 : vector<16x22xf32>
    %327 = vector.extract_strided_slice %315 {offsets = [3, 0], sizes = [16, 22], strides = [1, 1]} : vector<32x22xf32> to vector<16x22xf32>
    %cst_91 = arith.constant 0.109360695 : f32
    %328 = vector.broadcast %cst_91 : f32 to vector<16x22xf32>
    %329 = arith.mulf %327, %328 : vector<16x22xf32>
    %330 = arith.addf %326, %329 : vector<16x22xf32>
    %331 = vector.extract_strided_slice %315 {offsets = [4, 0], sizes = [16, 22], strides = [1, 1]} : vector<32x22xf32> to vector<16x22xf32>
    %cst_92 = arith.constant 0.213005543 : f32
    %332 = vector.broadcast %cst_92 : f32 to vector<16x22xf32>
    %333 = arith.mulf %331, %332 : vector<16x22xf32>
    %334 = arith.addf %330, %333 : vector<16x22xf32>
    %335 = vector.extract_strided_slice %315 {offsets = [5, 0], sizes = [16, 22], strides = [1, 1]} : vector<32x22xf32> to vector<16x22xf32>
    %cst_93 = arith.constant 0.266011745 : f32
    %336 = vector.broadcast %cst_93 : f32 to vector<16x22xf32>
    %337 = arith.mulf %335, %336 : vector<16x22xf32>
    %338 = arith.addf %334, %337 : vector<16x22xf32>
    %339 = vector.extract_strided_slice %315 {offsets = [6, 0], sizes = [16, 22], strides = [1, 1]} : vector<32x22xf32> to vector<16x22xf32>
    %cst_94 = arith.constant 0.213005543 : f32
    %340 = vector.broadcast %cst_94 : f32 to vector<16x22xf32>
    %341 = arith.mulf %339, %340 : vector<16x22xf32>
    %342 = arith.addf %338, %341 : vector<16x22xf32>
    %343 = vector.extract_strided_slice %315 {offsets = [7, 0], sizes = [16, 22], strides = [1, 1]} : vector<32x22xf32> to vector<16x22xf32>
    %cst_95 = arith.constant 0.109360695 : f32
    %344 = vector.broadcast %cst_95 : f32 to vector<16x22xf32>
    %345 = arith.mulf %343, %344 : vector<16x22xf32>
    %346 = arith.addf %342, %345 : vector<16x22xf32>
    %347 = vector.extract_strided_slice %315 {offsets = [8, 0], sizes = [16, 22], strides = [1, 1]} : vector<32x22xf32> to vector<16x22xf32>
    %cst_96 = arith.constant 0.0360007733 : f32
    %348 = vector.broadcast %cst_96 : f32 to vector<16x22xf32>
    %349 = arith.mulf %347, %348 : vector<16x22xf32>
    %350 = arith.addf %346, %349 : vector<16x22xf32>
    %351 = vector.extract_strided_slice %315 {offsets = [9, 0], sizes = [16, 22], strides = [1, 1]} : vector<32x22xf32> to vector<16x22xf32>
    %cst_97 = arith.constant 0.00759875868 : f32
    %352 = vector.broadcast %cst_97 : f32 to vector<16x22xf32>
    %353 = arith.mulf %351, %352 : vector<16x22xf32>
    %354 = arith.addf %350, %353 : vector<16x22xf32>
    %355 = vector.extract_strided_slice %315 {offsets = [10, 0], sizes = [16, 22], strides = [1, 1]} : vector<32x22xf32> to vector<16x22xf32>
    %cst_98 = arith.constant 0.00102838024 : f32
    %356 = vector.broadcast %cst_98 : f32 to vector<16x22xf32>
    %357 = arith.mulf %355, %356 : vector<16x22xf32>
    %358 = arith.addf %354, %357 : vector<16x22xf32>
    %359 = arith.mulf %7, %12 : vector<32x32xf32>
    %360 = vector.extract_strided_slice %359 {offsets = [0, 0], sizes = [32, 22], strides = [1, 1]} : vector<32x32xf32> to vector<32x22xf32>
    %cst_99 = arith.constant 0.00102838024 : f32
    %361 = vector.broadcast %cst_99 : f32 to vector<32x22xf32>
    %362 = arith.mulf %360, %361 : vector<32x22xf32>
    %363 = vector.extract_strided_slice %359 {offsets = [0, 1], sizes = [32, 22], strides = [1, 1]} : vector<32x32xf32> to vector<32x22xf32>
    %cst_100 = arith.constant 0.00759875868 : f32
    %364 = vector.broadcast %cst_100 : f32 to vector<32x22xf32>
    %365 = arith.mulf %363, %364 : vector<32x22xf32>
    %366 = arith.addf %362, %365 : vector<32x22xf32>
    %367 = vector.extract_strided_slice %359 {offsets = [0, 2], sizes = [32, 22], strides = [1, 1]} : vector<32x32xf32> to vector<32x22xf32>
    %cst_101 = arith.constant 0.0360007733 : f32
    %368 = vector.broadcast %cst_101 : f32 to vector<32x22xf32>
    %369 = arith.mulf %367, %368 : vector<32x22xf32>
    %370 = arith.addf %366, %369 : vector<32x22xf32>
    %371 = vector.extract_strided_slice %359 {offsets = [0, 3], sizes = [32, 22], strides = [1, 1]} : vector<32x32xf32> to vector<32x22xf32>
    %cst_102 = arith.constant 0.109360695 : f32
    %372 = vector.broadcast %cst_102 : f32 to vector<32x22xf32>
    %373 = arith.mulf %371, %372 : vector<32x22xf32>
    %374 = arith.addf %370, %373 : vector<32x22xf32>
    %375 = vector.extract_strided_slice %359 {offsets = [0, 4], sizes = [32, 22], strides = [1, 1]} : vector<32x32xf32> to vector<32x22xf32>
    %cst_103 = arith.constant 0.213005543 : f32
    %376 = vector.broadcast %cst_103 : f32 to vector<32x22xf32>
    %377 = arith.mulf %375, %376 : vector<32x22xf32>
    %378 = arith.addf %374, %377 : vector<32x22xf32>
    %379 = vector.extract_strided_slice %359 {offsets = [0, 5], sizes = [32, 22], strides = [1, 1]} : vector<32x32xf32> to vector<32x22xf32>
    %cst_104 = arith.constant 0.266011745 : f32
    %380 = vector.broadcast %cst_104 : f32 to vector<32x22xf32>
    %381 = arith.mulf %379, %380 : vector<32x22xf32>
    %382 = arith.addf %378, %381 : vector<32x22xf32>
    %383 = vector.extract_strided_slice %359 {offsets = [0, 6], sizes = [32, 22], strides = [1, 1]} : vector<32x32xf32> to vector<32x22xf32>
    %cst_105 = arith.constant 0.213005543 : f32
    %384 = vector.broadcast %cst_105 : f32 to vector<32x22xf32>
    %385 = arith.mulf %383, %384 : vector<32x22xf32>
    %386 = arith.addf %382, %385 : vector<32x22xf32>
    %387 = vector.extract_strided_slice %359 {offsets = [0, 7], sizes = [32, 22], strides = [1, 1]} : vector<32x32xf32> to vector<32x22xf32>
    %cst_106 = arith.constant 0.109360695 : f32
    %388 = vector.broadcast %cst_106 : f32 to vector<32x22xf32>
    %389 = arith.mulf %387, %388 : vector<32x22xf32>
    %390 = arith.addf %386, %389 : vector<32x22xf32>
    %391 = vector.extract_strided_slice %359 {offsets = [0, 8], sizes = [32, 22], strides = [1, 1]} : vector<32x32xf32> to vector<32x22xf32>
    %cst_107 = arith.constant 0.0360007733 : f32
    %392 = vector.broadcast %cst_107 : f32 to vector<32x22xf32>
    %393 = arith.mulf %391, %392 : vector<32x22xf32>
    %394 = arith.addf %390, %393 : vector<32x22xf32>
    %395 = vector.extract_strided_slice %359 {offsets = [0, 9], sizes = [32, 22], strides = [1, 1]} : vector<32x32xf32> to vector<32x22xf32>
    %cst_108 = arith.constant 0.00759875868 : f32
    %396 = vector.broadcast %cst_108 : f32 to vector<32x22xf32>
    %397 = arith.mulf %395, %396 : vector<32x22xf32>
    %398 = arith.addf %394, %397 : vector<32x22xf32>
    %399 = vector.extract_strided_slice %359 {offsets = [0, 10], sizes = [32, 22], strides = [1, 1]} : vector<32x32xf32> to vector<32x22xf32>
    %cst_109 = arith.constant 0.00102838024 : f32
    %400 = vector.broadcast %cst_109 : f32 to vector<32x22xf32>
    %401 = arith.mulf %399, %400 : vector<32x22xf32>
    %402 = arith.addf %398, %401 : vector<32x22xf32>
    %403 = vector.extract_strided_slice %402 {offsets = [0, 0], sizes = [16, 22], strides = [1, 1]} : vector<32x22xf32> to vector<16x22xf32>
    %cst_110 = arith.constant 0.00102838024 : f32
    %404 = vector.broadcast %cst_110 : f32 to vector<16x22xf32>
    %405 = arith.mulf %403, %404 : vector<16x22xf32>
    %406 = vector.extract_strided_slice %402 {offsets = [1, 0], sizes = [16, 22], strides = [1, 1]} : vector<32x22xf32> to vector<16x22xf32>
    %cst_111 = arith.constant 0.00759875868 : f32
    %407 = vector.broadcast %cst_111 : f32 to vector<16x22xf32>
    %408 = arith.mulf %406, %407 : vector<16x22xf32>
    %409 = arith.addf %405, %408 : vector<16x22xf32>
    %410 = vector.extract_strided_slice %402 {offsets = [2, 0], sizes = [16, 22], strides = [1, 1]} : vector<32x22xf32> to vector<16x22xf32>
    %cst_112 = arith.constant 0.0360007733 : f32
    %411 = vector.broadcast %cst_112 : f32 to vector<16x22xf32>
    %412 = arith.mulf %410, %411 : vector<16x22xf32>
    %413 = arith.addf %409, %412 : vector<16x22xf32>
    %414 = vector.extract_strided_slice %402 {offsets = [3, 0], sizes = [16, 22], strides = [1, 1]} : vector<32x22xf32> to vector<16x22xf32>
    %cst_113 = arith.constant 0.109360695 : f32
    %415 = vector.broadcast %cst_113 : f32 to vector<16x22xf32>
    %416 = arith.mulf %414, %415 : vector<16x22xf32>
    %417 = arith.addf %413, %416 : vector<16x22xf32>
    %418 = vector.extract_strided_slice %402 {offsets = [4, 0], sizes = [16, 22], strides = [1, 1]} : vector<32x22xf32> to vector<16x22xf32>
    %cst_114 = arith.constant 0.213005543 : f32
    %419 = vector.broadcast %cst_114 : f32 to vector<16x22xf32>
    %420 = arith.mulf %418, %419 : vector<16x22xf32>
    %421 = arith.addf %417, %420 : vector<16x22xf32>
    %422 = vector.extract_strided_slice %402 {offsets = [5, 0], sizes = [16, 22], strides = [1, 1]} : vector<32x22xf32> to vector<16x22xf32>
    %cst_115 = arith.constant 0.266011745 : f32
    %423 = vector.broadcast %cst_115 : f32 to vector<16x22xf32>
    %424 = arith.mulf %422, %423 : vector<16x22xf32>
    %425 = arith.addf %421, %424 : vector<16x22xf32>
    %426 = vector.extract_strided_slice %402 {offsets = [6, 0], sizes = [16, 22], strides = [1, 1]} : vector<32x22xf32> to vector<16x22xf32>
    %cst_116 = arith.constant 0.213005543 : f32
    %427 = vector.broadcast %cst_116 : f32 to vector<16x22xf32>
    %428 = arith.mulf %426, %427 : vector<16x22xf32>
    %429 = arith.addf %425, %428 : vector<16x22xf32>
    %430 = vector.extract_strided_slice %402 {offsets = [7, 0], sizes = [16, 22], strides = [1, 1]} : vector<32x22xf32> to vector<16x22xf32>
    %cst_117 = arith.constant 0.109360695 : f32
    %431 = vector.broadcast %cst_117 : f32 to vector<16x22xf32>
    %432 = arith.mulf %430, %431 : vector<16x22xf32>
    %433 = arith.addf %429, %432 : vector<16x22xf32>
    %434 = vector.extract_strided_slice %402 {offsets = [8, 0], sizes = [16, 22], strides = [1, 1]} : vector<32x22xf32> to vector<16x22xf32>
    %cst_118 = arith.constant 0.0360007733 : f32
    %435 = vector.broadcast %cst_118 : f32 to vector<16x22xf32>
    %436 = arith.mulf %434, %435 : vector<16x22xf32>
    %437 = arith.addf %433, %436 : vector<16x22xf32>
    %438 = vector.extract_strided_slice %402 {offsets = [9, 0], sizes = [16, 22], strides = [1, 1]} : vector<32x22xf32> to vector<16x22xf32>
    %cst_119 = arith.constant 0.00759875868 : f32
    %439 = vector.broadcast %cst_119 : f32 to vector<16x22xf32>
    %440 = arith.mulf %438, %439 : vector<16x22xf32>
    %441 = arith.addf %437, %440 : vector<16x22xf32>
    %442 = vector.extract_strided_slice %402 {offsets = [10, 0], sizes = [16, 22], strides = [1, 1]} : vector<32x22xf32> to vector<16x22xf32>
    %cst_120 = arith.constant 0.00102838024 : f32
    %443 = vector.broadcast %cst_120 : f32 to vector<16x22xf32>
    %444 = arith.mulf %442, %443 : vector<16x22xf32>
    %445 = arith.addf %441, %444 : vector<16x22xf32>
    %446 = arith.mulf %98, %98 : vector<16x22xf32>
    %447 = arith.mulf %184, %184 : vector<16x22xf32>
    %448 = arith.mulf %98, %184 : vector<16x22xf32>
    %449 = arith.subf %271, %446 : vector<16x22xf32>
    %450 = arith.subf %358, %447 : vector<16x22xf32>
    %451 = arith.subf %445, %448 : vector<16x22xf32>
    %c0_121 = arith.constant 0 : index
    %452 = memref.load %arg2[%c0_121] : memref<2xf32, #tpu.memory_space<smem>>
    %c1 = arith.constant 1 : index
    %453 = memref.load %arg2[%c1] : memref<2xf32, #tpu.memory_space<smem>>
    %cst_122 = arith.constant 2.000000e+00 : f32
    %454 = vector.broadcast %cst_122 : f32 to vector<16x22xf32>
    %455 = arith.mulf %454, %451 : vector<16x22xf32>
    %456 = vector.broadcast %453 : f32 to vector<16x22xf32>
    %457 = arith.addf %455, %456 : vector<16x22xf32>
    %458 = arith.addf %449, %450 : vector<16x22xf32>
    %459 = vector.broadcast %453 : f32 to vector<16x22xf32>
    %460 = arith.addf %458, %459 : vector<16x22xf32>
    %cst_123 = arith.constant 2.000000e+00 : f32
    %461 = vector.broadcast %cst_123 : f32 to vector<16x22xf32>
    %462 = arith.mulf %461, %448 : vector<16x22xf32>
    %463 = vector.broadcast %452 : f32 to vector<16x22xf32>
    %464 = arith.addf %462, %463 : vector<16x22xf32>
    %465 = arith.mulf %464, %457 : vector<16x22xf32>
    %466 = arith.addf %446, %447 : vector<16x22xf32>
    %467 = vector.broadcast %452 : f32 to vector<16x22xf32>
    %468 = arith.addf %466, %467 : vector<16x22xf32>
    %469 = arith.mulf %468, %460 : vector<16x22xf32>
    %470 = arith.divf %465, %469 : vector<16x22xf32>
    %471 = tpu.iota {dimensions = array<i32: 0>} : vector<16x22xi32>
    %c16_i32 = arith.constant 16 : i32
    %472 = arith.muli %arg1, %c16_i32 : i32
    %473 = vector.broadcast %472 : i32 to vector<16x22xi32>
    %474 = arith.addi %471, %473 : vector<16x22xi32>
    %c22_i32 = arith.constant 22 : i32
    %475 = vector.broadcast %c22_i32 : i32 to vector<16x22xi32>
    %476 = arith.cmpi slt, %474, %475 : vector<16x22xi32>
    %c0_124 = arith.constant 0 : index
    %477 = memref.load %arg8[%c0_124] : memref<1xf32, #tpu.memory_space<smem>>
    %cst_125 = arith.constant 0.000000e+00 : f32
    %478 = vector.broadcast %cst_125 : f32 to vector<16x22xf32>
    %479 = arith.select %476, %470, %478 : vector<16x22xi1>, vector<16x22xf32>
    %480 = vector.shape_cast %479 : vector<16x22xf32> to vector<1x16x22xf32>
    %cst_126 = arith.constant dense<0.000000e+00> : vector<1xf32>
    %481 = vector.multi_reduction <add>, %480, %cst_126 [1, 2] : vector<1x16x22xf32> to vector<1xf32>
    %482 = vector.shape_cast %481 : vector<1xf32> to vector<1x1x1xf32>
    %483 = vector.extract %482[0, 0, 0] : f32 from vector<1x1x1xf32>
    %484 = arith.addf %477, %483 : f32
    %c0_127 = arith.constant 0 : index
    %485 = memref.load %arg8[%c0_127] : memref<1xf32, #tpu.memory_space<smem>>
    memref.store %484, %arg8[%c0_127] : memref<1xf32, #tpu.memory_space<smem>>
    %c1_i32 = arith.constant 1 : i32
    %486 = arith.cmpi eq, %arg1, %c1_i32 : i32
    %487 = arith.extui %486 : i1 to i32
    %c0_i32_128 = arith.constant 0 : i32
    %488 = arith.cmpi ne, %487, %c0_i32_128 : i32
    scf.if %488 {
      %c0_129 = arith.constant 0 : index
      %489 = memref.load %arg8[%c0_129] : memref<1xf32, #tpu.memory_space<smem>>
      %490 = vector.broadcast %489 : f32 to vector<1x8x128xf32>
      %c0_130 = arith.constant 0 : index
      %c0_131 = arith.constant 0 : index
      %c0_132 = arith.constant 0 : index
      %491 = vector.load %arg7[%c0_130, %c0_131, %c0_132] : memref<1x8x128xf32, #tpu.memory_space<vmem>>, vector<1x8x128xf32>
      tpu.vector_store %arg7[%c0_130, %c0_131, %c0_132], %490 {strides = array<i32>} : memref<1x8x128xf32, #tpu.memory_space<vmem>>, vector<1x8x128xf32>,
    } else {
    }
    return
  }
  func.func @transform_0(%arg0: i32, %arg1: i32) -> i32 {
    %c0_i32 = arith.constant 0 : i32
    %c0_i32_0 = arith.constant 0 : i32
    return %c0_i32 : i32
  }
  func.func @transform_1(%arg0: i32, %arg1: i32) -> (i32, i32, i32) {
    %c0_i32 = arith.constant 0 : i32
    %c0_i32_0 = arith.constant 0 : i32
    return %arg0, %arg1, %c0_i32 : i32, i32, i32
  }
  func.func @transform_2(%arg0: i32, %arg1: i32) -> (i32, i32, i32) {
    %c1_i32 = arith.constant 1 : i32
    %0 = arith.addi %arg1, %c1_i32 : i32
    %c1_i32_0 = arith.constant 1 : i32
    %1 = arith.muli %0, %c1_i32_0 : i32
    %c1_i32_1 = arith.constant 1 : i32
    %2 = arith.minsi %1, %c1_i32_1 : i32
    %c0_i32 = arith.constant 0 : i32
    %c0_i32_2 = arith.constant 0 : i32
    return %arg0, %2, %c0_i32 : i32, i32, i32
  }
  func.func @transform_3(%arg0: i32, %arg1: i32) -> (i32, i32, i32) {
    %c0_i32 = arith.constant 0 : i32
    %c0_i32_0 = arith.constant 0 : i32
    return %arg0, %arg1, %c0_i32 : i32, i32, i32
  }
  func.func @transform_4(%arg0: i32, %arg1: i32) -> (i32, i32, i32) {
    %c1_i32 = arith.constant 1 : i32
    %0 = arith.addi %arg1, %c1_i32 : i32
    %c1_i32_0 = arith.constant 1 : i32
    %1 = arith.muli %0, %c1_i32_0 : i32
    %c1_i32_1 = arith.constant 1 : i32
    %2 = arith.minsi %1, %c1_i32_1 : i32
    %c0_i32 = arith.constant 0 : i32
    %c0_i32_2 = arith.constant 0 : i32
    return %arg0, %2, %c0_i32 : i32, i32, i32
  }
  func.func @transform_5(%arg0: i32, %arg1: i32) -> (i32, i32, i32) {
    %c0_i32 = arith.constant 0 : i32
    %c0_i32_0 = arith.constant 0 : i32
    %c0_i32_1 = arith.constant 0 : i32
    return %arg0, %c0_i32, %c0_i32_0 : i32, i32, i32
  }
}

</mosaic_0001>

<llo_original>
// kernel: tpu_custom_call.1
$region0: #{tpu_custom_call.1}
  #allocation0 [shape = 'u32[]', space=smem, size = 0x4, offset = 0x4, fixed_abs, tag = 'smem constant byte address 0x4 - core index']
  #allocation1 [shape = 'u32[144,128]{1,0:T(1,128)}', space=vmem, size = 0x12000, scoped, tag = 'internal scratch']
  #allocation2 [shape = 'f32[1]{0:T(128)}', space=smem, size = 0x200, scoped, tag = 'scratch operand']
  %s0 = inlined_call_operand.hbm [shape: f32[2], index: 0, kind: input, shape index: {}]
  %s1 = inlined_call_operand.hbm [shape: f32[6,32,32], index: 1, kind: input, shape index: {}]
  %s2 = inlined_call_operand.hbm [shape: f32[6,32,32], index: 2, kind: input, shape index: {}]
  %s3 = inlined_call_operand.hbm [shape: f32[6,32,32], index: 3, kind: input, shape index: {}]
  %s4 = inlined_call_operand.hbm [shape: f32[6,32,32], index: 4, kind: input, shape index: {}]
  %s5 = inlined_call_operand.hbm [shape: f32[6,8,128], index: 5, kind: output, shape index: {}]
  %s6 = sld [smem:[#allocation0]]
  $region81: #{tpu_custom_call.1} parent=0
    _
  %s8 = ssub.s32 1, %s6
  %s9 = scalar_select 0, %s8, %s6
  $region1: #{tpu_custom_call.1} parent=0
    #allocation3 [shape = 'u8[512]{0}', space=smem, size = 0x200, scoped, tag = 'input window, operand 0, single buffered']
    #allocation4 [shape = 's32[2]{0}', space=sflag, size = 0x8, scoped, tag = 'scoped memory for tpu_custom_call.1']
    #allocation5 [shape = 's32[2]{0}', space=sflag, size = 0x8, scoped, tag = 'scoped memory for tpu_custom_call.1']
    #allocation6 [shape = 's32[2]{0}', space=sflag, size = 0x8, scoped, tag = 'scoped memory for tpu_custom_call.1']
    #allocation7 [shape = 'u8[16384]{0}', space=vmem, size = 0x4000, scoped, tag = 'input window, operand 1']
    #allocation8 [shape = 'u8[16384]{0}', space=vmem, size = 0x4000, scoped, tag = 'input window, operand 2']
    #allocation9 [shape = 's32[2]{0}', space=sflag, size = 0x8, scoped, tag = 'scoped memory for tpu_custom_call.1']
    #allocation10 [shape = 'u8[16384]{0}', space=vmem, size = 0x4000, scoped, tag = 'input window, operand 3']
    #allocation11 [shape = 'u8[16384]{0}', space=vmem, size = 0x4000, scoped, tag = 'input window, operand 4']
    #allocation12 [shape = 's32[2]{0}', space=sflag, size = 0x8, scoped, tag = 'scoped memory for tpu_custom_call.1']
    #allocation13 [shape = 'u8[8192]{0}', space=vmem, size = 0x2000, scoped, tag = 'output window, operand 0']
    %10 = vsyncpa [#allocation6], 0
    %11 = vsyncpa [#allocation4], 0
    %s12 = scalar_lea.sflag [#allocation4], 1
    %13 = vsyncpa %s12, 0
    %14 = vsyncpa [#allocation9], 0
    %s15 = scalar_lea.sflag [#allocation9], 1
    %16 = vsyncpa %s15, 0
    %17 = vsyncpa [#allocation12], 0
    %s18 = scalar_lea.sflag [#allocation12], 1
    %19 = vsyncpa %s18, 0
    %20 = vsyncpa [#allocation5], 0
    %s21 = scalar_lea.sflag [#allocation5], 1
    %22 = vsyncpa %s21, 0
    loop: start=0, step=1, limit=14
    $region2: #{tpu_custom_call.1} parent=1 // loop_pre_header
      _
    $region3: #{tpu_custom_call.1} parent=1 // loop_header
      %s24 = sphi 0, %s28
      %p25 = scmp.ge.s32.totalorder %s24, 14
      %s31 = sphi 0, %s43
      %s32 = sphi 0, %s39
      %s33 = sphi 0, %s31
      %s34 = sphi 0, %s32
      %s35 = sphi 0, %s33
      %s36 = sphi 0, %s34
      %s44 = sphi 0, %s44
      %s46 = sphi 0, %s44
      %s47 = sphi 0, %s46
      %s61 = sphi 0, %s47
      %s69 = sphi 0, %s71
      %s72 = sphi 0, %s69
      %s73 = sphi 0, %s72
      %s89 = sphi 0, %s73
      %s103 = sphi 0, %s105
      %s106 = sphi 0, %s103
      %s107 = sphi 0, %s106
      %s123 = sphi 0, %s107
      %s131 = sphi 0, %s133
      %s134 = sphi 0, %s131
      %s135 = sphi 0, %s134
      %s151 = sphi 0, %s135
      %s165 = sphi 0, %s167
      %s168 = sphi 0, %s165
      %s169 = sphi 0, %s168
      %s185 = sphi 0, %s169
      %s191 = sphi 0, %s193
      %s194 = sphi 0, %s191
      %s195 = sphi 0, %s194
      %s211 = sphi 0, %s195
    $region4: #{tpu_custom_call.1} parent=1 // loop_header_branch
      %27 = sbr.rel (%p25) target = $region8
    $region5: #{tpu_custom_call.1} parent=1 // loop_body
      %s29 = ssub.s32 %s24, 1
      %s30 = ssub.s32 %s24, 2
      %s37 = sadd.s32 1, %s32
      %p38 = scmp.ge.s32.totalorder %s37, 2
      %s39 = scalar_select %p38, 0, %s37
      %s40 = sadd.s32 1, %s31
      %s41 = scalar_select %p38, %s40, %s31
      %p42 = scmp.ge.s32.totalorder %s41, 6
      %s43 = scalar_select %p42, 0, %s41
      %s45 = sadd.s32 %s44, 1
      %p48 = scmp.eq.s32.totalorder %s24, 11
      %p49 = scmp.ne.s32.totalorder %s44, %s46
      %p50 = scmp.eq.s32.totalorder %s24, 0
      %p51 = por %p49, %p50
      %p52 = scmp.ne.s32.totalorder %s44, %s46
      %p53 = scmp.eq.s32.totalorder %s29, 11
      %p54 = por %p52, %p53
      %p55 = scmp.ne.s32.totalorder %s46, %s47
      %p56 = scmp.eq.s32.totalorder %s29, 0
      %p57 = por %p55, %p56
      %p58 = scmp.ne.s32.totalorder %s46, %s47
      %p59 = scmp.eq.s32.totalorder %s30, 11
      %p60 = por %p58, %p59
      %p62 = scmp.ne.s32.totalorder %s47, %s61
      %p63 = scmp.eq.s32.totalorder %s30, 0
      %p64 = por %p62, %p63
      %s65 = ssub.s32 %s31, %s43
      %s66 = ssub.s32 %s32, %s39
      %s67 = sor.u32 %s65, %s66
      %p68 = scmp.eq.s32.totalorder %s67, 0
      %s70 = sadd.s32 %s69, 1
      %s71 = scalar_select %p68, %s69, %s70
      %p74 = pneg %p68
      %p75 = scmp.eq.s32.totalorder %s24, 11
      %p76 = por %p74, %p75
      %p77 = scmp.ne.s32.totalorder %s69, %s72
      %p78 = scmp.eq.s32.totalorder %s24, 0
      %p79 = por %p77, %p78
      %p80 = scmp.ne.s32.totalorder %s69, %s72
      %p81 = scmp.eq.s32.totalorder %s29, 11
      %p82 = por %p80, %p81
      %p83 = scmp.ne.s32.totalorder %s72, %s73
      %p84 = scmp.eq.s32.totalorder %s29, 0
      %p85 = por %p83, %p84
      %p86 = scmp.ne.s32.totalorder %s72, %s73
      %p87 = scmp.eq.s32.totalorder %s30, 11
      %p88 = por %p86, %p87
      %p90 = scmp.ne.s32.totalorder %s73, %s89
      %p91 = scmp.eq.s32.totalorder %s30, 0
      %p92 = por %p90, %p91
      %s93 = sadd.s32 %s32, 1
      %p94 = scmp.lt.s32.totalorder %s93, 1
      %s95 = scalar_select %p94, %s93, 1
      %s96 = sadd.s32 %s39, 1
      %p97 = scmp.lt.s32.totalorder %s96, 1
      %s98 = scalar_select %p97, %s96, 1
      %s99 = ssub.s32 %s31, %s43
      %s100 = ssub.s32 %s95, %s98
      %s101 = sor.u32 %s99, %s100
      %p102 = scmp.eq.s32.totalorder %s101, 0
      %s104 = sadd.s32 %s103, 1
      %s105 = scalar_select %p102, %s103, %s104
      %p108 = pneg %p102
      %p109 = scmp.eq.s32.totalorder %s24, 11
      %p110 = por %p108, %p109
      %p111 = scmp.ne.s32.totalorder %s103, %s106
      %p112 = scmp.eq.s32.totalorder %s24, 0
      %p113 = por %p111, %p112
      %p114 = scmp.ne.s32.totalorder %s103, %s106
      %p115 = scmp.eq.s32.totalorder %s29, 11
      %p116 = por %p114, %p115
      %p117 = scmp.ne.s32.totalorder %s106, %s107
      %p118 = scmp.eq.s32.totalorder %s29, 0
      %p119 = por %p117, %p118
      %p120 = scmp.ne.s32.totalorder %s106, %s107
      %p121 = scmp.eq.s32.totalorder %s30, 11
      %p122 = por %p120, %p121
      %p124 = scmp.ne.s32.totalorder %s107, %s123
      %p125 = scmp.eq.s32.totalorder %s30, 0
      %p126 = por %p124, %p125
      %s127 = ssub.s32 %s31, %s43
      %s128 = ssub.s32 %s32, %s39
      %s129 = sor.u32 %s127, %s128
      %p130 = scmp.eq.s32.totalorder %s129, 0
      %s132 = sadd.s32 %s131, 1
      %s133 = scalar_select %p130, %s131, %s132
      %p136 = pneg %p130
      %p137 = scmp.eq.s32.totalorder %s24, 11
      %p138 = por %p136, %p137
      %p139 = scmp.ne.s32.totalorder %s131, %s134
      %p140 = scmp.eq.s32.totalorder %s24, 0
      %p141 = por %p139, %p140
      %p142 = scmp.ne.s32.totalorder %s131, %s134
      %p143 = scmp.eq.s32.totalorder %s29, 11
      %p144 = por %p142, %p143
      %p145 = scmp.ne.s32.totalorder %s134, %s135
      %p146 = scmp.eq.s32.totalorder %s29, 0
      %p147 = por %p145, %p146
      %p148 = scmp.ne.s32.totalorder %s134, %s135
      %p149 = scmp.eq.s32.totalorder %s30, 11
      %p150 = por %p148, %p149
      %p152 = scmp.ne.s32.totalorder %s135, %s151
      %p153 = scmp.eq.s32.totalorder %s30, 0
      %p154 = por %p152, %p153
      %s155 = sadd.s32 %s32, 1
      %p156 = scmp.lt.s32.totalorder %s155, 1
      %s157 = scalar_select %p156, %s155, 1
      %s158 = sadd.s32 %s39, 1
      %p159 = scmp.lt.s32.totalorder %s158, 1
      %s160 = scalar_select %p159, %s158, 1
      %s161 = ssub.s32 %s31, %s43
      %s162 = ssub.s32 %s157, %s160
      %s163 = sor.u32 %s161, %s162
      %p164 = scmp.eq.s32.totalorder %s163, 0
      %s166 = sadd.s32 %s165, 1
      %s167 = scalar_select %p164, %s165, %s166
      %p170 = pneg %p164
      %p171 = scmp.eq.s32.totalorder %s24, 11
      %p172 = por %p170, %p171
      %p173 = scmp.ne.s32.totalorder %s165, %s168
      %p174 = scmp.eq.s32.totalorder %s24, 0
      %p175 = por %p173, %p174
      %p176 = scmp.ne.s32.totalorder %s165, %s168
      %p177 = scmp.eq.s32.totalorder %s29, 11
      %p178 = por %p176, %p177
      %p179 = scmp.ne.s32.totalorder %s168, %s169
      %p180 = scmp.eq.s32.totalorder %s29, 0
      %p181 = por %p179, %p180
      %p182 = scmp.ne.s32.totalorder %s168, %s169
      %p183 = scmp.eq.s32.totalorder %s30, 11
      %p184 = por %p182, %p183
      %p186 = scmp.ne.s32.totalorder %s169, %s185
      %p187 = scmp.eq.s32.totalorder %s30, 0
      %p188 = por %p186, %p187
      %s189 = ssub.s32 %s31, %s43
      %p190 = scmp.eq.s32.totalorder %s189, 0
      %s192 = sadd.s32 %s191, 1
      %s193 = scalar_select %p190, %s191, %s192
      %p196 = pneg %p190
      %p197 = scmp.eq.s32.totalorder %s24, 11
      %p198 = por %p196, %p197
      %p199 = scmp.ne.s32.totalorder %s191, %s194
      %p200 = scmp.eq.s32.totalorder %s24, 0
      %p201 = por %p199, %p200
      %p202 = scmp.ne.s32.totalorder %s191, %s194
      %p203 = scmp.eq.s32.totalorder %s29, 11
      %p204 = por %p202, %p203
      %p205 = scmp.ne.s32.totalorder %s194, %s195
      %p206 = scmp.eq.s32.totalorder %s29, 0
      %p207 = por %p205, %p206
      %p208 = scmp.ne.s32.totalorder %s194, %s195
      %p209 = scmp.eq.s32.totalorder %s30, 11
      %p210 = por %p208, %p209
      %p212 = scmp.ne.s32.totalorder %s195, %s211
      %p213 = scmp.eq.s32.totalorder %s30, 0
      %p214 = por %p212, %p213
      %p215 = scmp.le.s32.totalorder 1, %s24
      %p216 = scmp.lt.s32.totalorder %s24, 13
      %p217 = pnand %p215, %p216
      %p218 = pneg %p217
      // Predicated region
      $region9: #{tpu_custom_call.1} parent=5 // pred_check
        _
      $region10: #{tpu_custom_call.1} parent=5 // pred_check_branch
        %220 = sbr.rel (%p217) target = $region12
      $region11: #{tpu_custom_call.1} parent=5 // pred_region
        %s221 = ssub.s32 %s24, 1
        // Predicated region
        $region13: #{tpu_custom_call.1} parent=11 // pred_check
          %p222 = pneg %p57
        $region14: #{tpu_custom_call.1} parent=11 // pred_check_branch
          %224 = sbr.rel (%p222) target = $region16
        $region15: #{tpu_custom_call.1} parent=11 // pred_region
          %s226 = ssub.s32 16, 16
          %227 = vsyncadd [#allocation6], %s226
          %230 = dma.hbm_to_smem %s0, 16, [#allocation3], [#allocation6]
        $region16: #{tpu_custom_call.1} parent=11 // pred_fallthru
          _
      $region12: #{tpu_custom_call.1} parent=5 // pred_fallthru
        _
      %p231 = scmp.lt.s32.totalorder %s24, 12
      // Predicated region
      $region17: #{tpu_custom_call.1} parent=5 // pred_check
        %p232 = pneg %p231
      $region18: #{tpu_custom_call.1} parent=5 // pred_check_branch
        %234 = sbr.rel (%p232) target = $region20
      $region19: #{tpu_custom_call.1} parent=5 // pred_region
        // Predicated region
        $region21: #{tpu_custom_call.1} parent=19 // pred_check
          %p235 = pneg %p79
        $region22: #{tpu_custom_call.1} parent=19 // pred_check_branch
          %237 = sbr.rel (%p235) target = $region24
        $region23: #{tpu_custom_call.1} parent=19 // pred_region
          %s238 = sand.u32 %s69, 1
          %s239 = scalar_lea.sflag [#allocation4], %s238
          %s240 = sand.u32 %s69, 1
          %s241 = smul.addr %s240, 16
          %s242 = scalar_lea.vmem [#allocation7], %s241
          %s243 = smul.u32 2, %s32
          %s245 = ssub.s32 256, 256
          %246 = vsyncadd %s239, %s245
          %s247 = smul.addr %s31, 4
          %s248 = sadd.s32 %s243, %s247
          %s249 = smul.addr %s248, 128
          %s250 = scalar_lea.hbm %s1, %s249
          %s251 = sshll.u32 %s242, 4
          %s252 = int_to_ptr.vmem [resolvable:$true] %s251
          %257 = dma.hbm_to_vmem [thread:$0]  %s250, 256, %s252, %s239, 128, 128, 8
        $region24: #{tpu_custom_call.1} parent=19 // pred_fallthru
          _
        // Predicated region
        $region25: #{tpu_custom_call.1} parent=19 // pred_check
          %p258 = pneg %p113
        $region26: #{tpu_custom_call.1} parent=19 // pred_check_branch
          %260 = sbr.rel (%p258) target = $region28
        $region27: #{tpu_custom_call.1} parent=19 // pred_region
          %s261 = sand.u32 %s24, 1
          %s262 = scalar_lea.sflag [#allocation9], %s261
          %s263 = sand.u32 %s103, 1
          %s264 = smul.addr %s263, 16
          %s265 = scalar_lea.vmem [#allocation8], %s264
          %s266 = sadd.s32 %s32, 1
          %p267 = scmp.lt.s32.totalorder %s266, 1
          %s268 = scalar_select %p267, %s266, 1
          %s269 = smul.u32 2, %s268
          %s271 = ssub.s32 256, 256
          %272 = vsyncadd %s262, %s271
          %s273 = smul.addr %s31, 4
          %s274 = sadd.s32 %s269, %s273
          %s275 = smul.addr %s274, 128
          %s276 = scalar_lea.hbm %s2, %s275
          %s277 = sshll.u32 %s265, 4
          %s278 = int_to_ptr.vmem [resolvable:$true] %s277
          %283 = dma.hbm_to_vmem [thread:$0]  %s276, 256, %s278, %s262, 128, 128, 8
        $region28: #{tpu_custom_call.1} parent=19 // pred_fallthru
          _
        // Predicated region
        $region29: #{tpu_custom_call.1} parent=19 // pred_check
          %p284 = pneg %p141
        $region30: #{tpu_custom_call.1} parent=19 // pred_check_branch
          %286 = sbr.rel (%p284) target = $region32
        $region31: #{tpu_custom_call.1} parent=19 // pred_region
          %s287 = sand.u32 %s24, 1
          %s288 = scalar_lea.sflag [#allocation9], %s287
          %s289 = sand.u32 %s131, 1
          %s290 = smul.addr %s289, 16
          %s291 = scalar_lea.vmem [#allocation10], %s290
          %s292 = smul.u32 2, %s32
          %s294 = ssub.s32 256, 256
          %295 = vsyncadd %s288, %s294
          %s296 = smul.addr %s31, 4
          %s297 = sadd.s32 %s292, %s296
          %s298 = smul.addr %s297, 128
          %s299 = scalar_lea.hbm %s3, %s298
          %s300 = sshll.u32 %s291, 4
          %s301 = int_to_ptr.vmem [resolvable:$true] %s300
          %306 = dma.hbm_to_vmem [thread:$0]  %s299, 256, %s301, %s288, 128, 128, 8
        $region32: #{tpu_custom_call.1} parent=19 // pred_fallthru
          _
        // Predicated region
        $region33: #{tpu_custom_call.1} parent=19 // pred_check
          %p307 = pneg %p175
        $region34: #{tpu_custom_call.1} parent=19 // pred_check_branch
          %309 = sbr.rel (%p307) target = $region36
        $region35: #{tpu_custom_call.1} parent=19 // pred_region
          %s310 = sand.u32 %s165, 1
          %s311 = scalar_lea.sflag [#allocation12], %s310
          %s312 = sand.u32 %s165, 1
          %s313 = smul.addr %s312, 16
          %s314 = scalar_lea.vmem [#allocation11], %s313
          %s315 = sadd.s32 %s32, 1
          %p316 = scmp.lt.s32.totalorder %s315, 1
          %s317 = scalar_select %p316, %s315, 1
          %s318 = smul.u32 2, %s317
          %s320 = ssub.s32 256, 256
          %321 = vsyncadd %s311, %s320
          %s322 = smul.addr %s31, 4
          %s323 = sadd.s32 %s318, %s322
          %s324 = smul.addr %s323, 128
          %s325 = scalar_lea.hbm %s4, %s324
          %s326 = sshll.u32 %s314, 4
          %s327 = int_to_ptr.vmem [resolvable:$true] %s326
          %332 = dma.hbm_to_vmem [thread:$0]  %s325, 256, %s327, %s311, 128, 128, 8
        $region36: #{tpu_custom_call.1} parent=19 // pred_fallthru
          _
      $region20: #{tpu_custom_call.1} parent=5 // pred_fallthru
        _
      %p333 = scmp.le.s32.totalorder 1, %s24
      %p334 = scmp.lt.s32.totalorder %s24, 13
      %p335 = pnand %p333, %p334
      %p336 = pneg %p335
      // Predicated region
      $region37: #{tpu_custom_call.1} parent=5 // pred_check
        _
      $region38: #{tpu_custom_call.1} parent=5 // pred_check_branch
        %338 = sbr.rel (%p335) target = $region40
      $region39: #{tpu_custom_call.1} parent=5 // pred_region
        %s339 = ssub.s32 %s24, 1
        // Predicated region
        $region41: #{tpu_custom_call.1} parent=39 // pred_check
          %p340 = pneg %p57
        $region42: #{tpu_custom_call.1} parent=39 // pred_check_branch
          %342 = sbr.rel (%p340) target = $region44
        $region43: #{tpu_custom_call.1} parent=39 // pred_region
          %343 = dma.done [#allocation6], 16
        $region44: #{tpu_custom_call.1} parent=39 // pred_fallthru
          _
        %s344 = sand.u32 %s72, 1
        %s345 = scalar_lea.sflag [#allocation4], %s344
        %s346 = sand.u32 %s72, 1
        %s347 = smul.addr %s346, 16
        %s348 = scalar_lea.vmem [#allocation7], %s347
        // Predicated region
        $region45: #{tpu_custom_call.1} parent=39 // pred_check
          %p349 = pneg %p85
        $region46: #{tpu_custom_call.1} parent=39 // pred_check_branch
          %351 = sbr.rel (%p349) target = $region48
        $region47: #{tpu_custom_call.1} parent=39 // pred_region
          %352 = dma.done %s345, 256
        $region48: #{tpu_custom_call.1} parent=39 // pred_fallthru
          _
        %s353 = sand.u32 %s29, 1
        %s354 = scalar_lea.sflag [#allocation9], %s353
        %s355 = sand.u32 %s106, 1
        %s356 = smul.addr %s355, 16
        %s357 = scalar_lea.vmem [#allocation8], %s356
        // Predicated region
        $region49: #{tpu_custom_call.1} parent=39 // pred_check
          %p358 = pneg %p119
        $region50: #{tpu_custom_call.1} parent=39 // pred_check_branch
          %360 = sbr.rel (%p358) target = $region52
        $region51: #{tpu_custom_call.1} parent=39 // pred_region
          %361 = dma.done %s354, 256
        $region52: #{tpu_custom_call.1} parent=39 // pred_fallthru
          _
        %s362 = sand.u32 %s29, 1
        %s363 = scalar_lea.sflag [#allocation9], %s362
        %s364 = sand.u32 %s134, 1
        %s365 = smul.addr %s364, 16
        %s366 = scalar_lea.vmem [#allocation10], %s365
        // Predicated region
        $region53: #{tpu_custom_call.1} parent=39 // pred_check
          %p367 = pneg %p147
        $region54: #{tpu_custom_call.1} parent=39 // pred_check_branch
          %369 = sbr.rel (%p367) target = $region56
        $region55: #{tpu_custom_call.1} parent=39 // pred_region
          %370 = dma.done %s363, 256
        $region56: #{tpu_custom_call.1} parent=39 // pred_fallthru
          _
        %s371 = sand.u32 %s168, 1
        %s372 = scalar_lea.sflag [#allocation12], %s371
        %s373 = sand.u32 %s168, 1
        %s374 = smul.addr %s373, 16
        %s375 = scalar_lea.vmem [#allocation11], %s374
        // Predicated region
        $region57: #{tpu_custom_call.1} parent=39 // pred_check
          %p376 = pneg %p181
        $region58: #{tpu_custom_call.1} parent=39 // pred_check_branch
          %378 = sbr.rel (%p376) target = $region60
        $region59: #{tpu_custom_call.1} parent=39 // pred_region
          %379 = dma.done %s372, 256
        $region60: #{tpu_custom_call.1} parent=39 // pred_fallthru
          _
        %380 = sfence
        %p381 = pneg %p57
        %p382 = pneg %p54
        %s383 = sand.u32 %s72, 1
        %s384 = scalar_lea.sflag [#allocation4], %s383
        %s385 = sand.u32 %s72, 1
        %s386 = smul.addr %s385, 16
        %s387 = scalar_lea.vmem [#allocation7], %s386
        %p388 = pneg %p85
        %p389 = pneg %p82
        %s390 = sand.u32 %s29, 1
        %s391 = scalar_lea.sflag [#allocation9], %s390
        %s392 = sand.u32 %s106, 1
        %s393 = smul.addr %s392, 16
        %s394 = scalar_lea.vmem [#allocation8], %s393
        %p395 = pneg %p119
        %p396 = pneg %p116
        %s397 = sand.u32 %s29, 1
        %s398 = scalar_lea.sflag [#allocation9], %s397
        %s399 = sand.u32 %s134, 1
        %s400 = smul.addr %s399, 16
        %s401 = scalar_lea.vmem [#allocation10], %s400
        %p402 = pneg %p147
        %p403 = pneg %p144
        %s404 = sand.u32 %s168, 1
        %s405 = scalar_lea.sflag [#allocation12], %s404
        %s406 = sand.u32 %s168, 1
        %s407 = smul.addr %s406, 16
        %s408 = scalar_lea.vmem [#allocation11], %s407
        %p409 = pneg %p181
        %p410 = pneg %p178
        %p411 = pneg %p207
        %p412 = pneg %p204
        %s413 = sand.u32 %s194, 1
        %s414 = scalar_lea.sflag [#allocation5], %s413
        %s415 = sand.u32 %s194, 1
        %s416 = smul.addr %s415, 8
        %s417 = scalar_lea.vmem [#allocation13], %s416
        %s418 = smul.u32 2, %s34
        %s419 = sadd.s32 %s34, 1
        %p420 = scmp.lt.s32.totalorder %s419, 1
        %s421 = scalar_select %p420, %s419, 1
        %s422 = smul.u32 2, %s421
        %s423 = smul.u32 2, %s34
        %s424 = sadd.s32 %s34, 1
        %p425 = scmp.lt.s32.totalorder %s424, 1
        %s426 = scalar_select %p425, %s424, 1
        %s427 = smul.u32 2, %s426
        %p428 = scmp.eq.s32.totalorder %s34, 0
        // Predicated region
        $region61: #{tpu_custom_call.1} parent=39 // pred_check
          %p429 = pneg %p428
        $region62: #{tpu_custom_call.1} parent=39 // pred_check_branch
          %431 = sbr.rel (%p429) target = $region64
        $region63: #{tpu_custom_call.1} parent=39 // pred_region
          %s432 = scalar_lea.smem [#allocation2], 0
          %433 = sst [smem:[%s432]] 0.0
        $region64: #{tpu_custom_call.1} parent=39 // pred_fallthru
          _
        %v434 = vld [vmem:[%s348] sm:$0xff]
        %v435 = vld [vmem:[%s348 + $0x8] sm:$0xff]
        %v436 = vld [vmem:[%s357] sm:$0xff]
        %v437 = vld [vmem:[%s357 + $0x8] sm:$0xff]
        %v438 = vld [vmem:[%s366] sm:$0xff]
        %v439 = vld [vmem:[%s366 + $0x8] sm:$0xff]
        %v440 = vld [vmem:[%s375] sm:$0xff]
        %v441 = vld [vmem:[%s375 + $0x8] sm:$0xff]
        %v442 = vmul.f32 %v434, 0.0010283802
        %v443 = vmul.f32 %v435, 0.0010283802
        %v444 = vmul.f32 %v436, 0.0010283802
        %v445 = vmul.f32 %v437, 0.0010283802
        %v446 = vmul.f32 %v434, 0.0075987587
        %v447 = vmul.f32 %v435, 0.0075987587
        %v448 = vmul.f32 %v436, 0.0075987587
        %v449 = vmul.f32 %v437, 0.0075987587
        %454 = vrot.lane.b32.xlu0 %v446, 127
        %v455 = vpop.permute.xlu0 %454
        %456 = vrot.lane.b32.xlu0 %v447, 127
        %v457 = vpop.permute.xlu0 %456
        %458 = vrot.lane.b32.xlu0 %v448, 127
        %v459 = vpop.permute.xlu0 %458
        %460 = vrot.lane.b32.xlu0 %v449, 127
        %v461 = vpop.permute.xlu0 %460
        %v466 = vadd.f32 %v442, %v455
        %v467 = vadd.f32 %v443, %v457
        %v468 = vadd.f32 %v444, %v459
        %v469 = vadd.f32 %v445, %v461
        %v470 = vmul.f32 %v434, 0.036000773
        %v471 = vmul.f32 %v435, 0.036000773
        %v472 = vmul.f32 %v436, 0.036000773
        %v473 = vmul.f32 %v437, 0.036000773
        %478 = vrot.lane.b32.xlu0 %v470, 126
        %v479 = vpop.permute.xlu0 %478
        %480 = vrot.lane.b32.xlu0 %v471, 126
        %v481 = vpop.permute.xlu0 %480
        %482 = vrot.lane.b32.xlu0 %v472, 126
        %v483 = vpop.permute.xlu0 %482
        %484 = vrot.lane.b32.xlu0 %v473, 126
        %v485 = vpop.permute.xlu0 %484
        %v490 = vadd.f32 %v466, %v479
        %v491 = vadd.f32 %v467, %v481
        %v492 = vadd.f32 %v468, %v483
        %v493 = vadd.f32 %v469, %v485
        %v494 = vmul.f32 %v434, 0.109360695
        %v495 = vmul.f32 %v435, 0.109360695
        %v496 = vmul.f32 %v436, 0.109360695
        %v497 = vmul.f32 %v437, 0.109360695
        %502 = vrot.lane.b32.xlu0 %v494, 125
        %v503 = vpop.permute.xlu0 %502
        %504 = vrot.lane.b32.xlu0 %v495, 125
        %v505 = vpop.permute.xlu0 %504
        %506 = vrot.lane.b32.xlu0 %v496, 125
        %v507 = vpop.permute.xlu0 %506
        %508 = vrot.lane.b32.xlu0 %v497, 125
        %v509 = vpop.permute.xlu0 %508
        %v514 = vadd.f32 %v490, %v503
        %v515 = vadd.f32 %v491, %v505
        %v516 = vadd.f32 %v492, %v507
        %v517 = vadd.f32 %v493, %v509
        %v518 = vmul.f32 %v434, 0.21300554
        %v519 = vmul.f32 %v435, 0.21300554
        %v520 = vmul.f32 %v436, 0.21300554
        %v521 = vmul.f32 %v437, 0.21300554
        %526 = vrot.lane.b32.xlu0 %v518, 124
        %v527 = vpop.permute.xlu0 %526
        %528 = vrot.lane.b32.xlu0 %v519, 124
        %v529 = vpop.permute.xlu0 %528
        %530 = vrot.lane.b32.xlu0 %v520, 124
        %v531 = vpop.permute.xlu0 %530
        %532 = vrot.lane.b32.xlu0 %v521, 124
        %v533 = vpop.permute.xlu0 %532
        %v538 = vadd.f32 %v514, %v527
        %v539 = vadd.f32 %v515, %v529
        %v540 = vadd.f32 %v516, %v531
        %v541 = vadd.f32 %v517, %v533
        %v542 = vmul.f32 %v434, 0.26601174
        %v543 = vmul.f32 %v435, 0.26601174
        %v544 = vmul.f32 %v436, 0.26601174
        %v545 = vmul.f32 %v437, 0.26601174
        %550 = vrot.lane.b32.xlu0 %v542, 123
        %v551 = vpop.permute.xlu0 %550
        %552 = vrot.lane.b32.xlu0 %v543, 123
        %v553 = vpop.permute.xlu0 %552
        %554 = vrot.lane.b32.xlu0 %v544, 123
        %v555 = vpop.permute.xlu0 %554
        %556 = vrot.lane.b32.xlu0 %v545, 123
        %v557 = vpop.permute.xlu0 %556
        %v562 = vadd.f32 %v538, %v551
        %v563 = vadd.f32 %v539, %v553
        %v564 = vadd.f32 %v540, %v555
        %v565 = vadd.f32 %v541, %v557
        %566 = vrot.lane.b32.xlu0 %v518, 122
        %v567 = vpop.permute.xlu0 %566
        %568 = vrot.lane.b32.xlu0 %v519, 122
        %v569 = vpop.permute.xlu0 %568
        %570 = vrot.lane.b32.xlu0 %v520, 122
        %v571 = vpop.permute.xlu0 %570
        %572 = vrot.lane.b32.xlu0 %v521, 122
        %v573 = vpop.permute.xlu0 %572
        %v578 = vadd.f32 %v562, %v567
        %v579 = vadd.f32 %v563, %v569
        %v580 = vadd.f32 %v564, %v571
        %v581 = vadd.f32 %v565, %v573
        %582 = vrot.lane.b32.xlu0 %v494, 121
        %v583 = vpop.permute.xlu0 %582
        %584 = vrot.lane.b32.xlu0 %v495, 121
        %v585 = vpop.permute.xlu0 %584
        %586 = vrot.lane.b32.xlu0 %v496, 121
        %v587 = vpop.permute.xlu0 %586
        %588 = vrot.lane.b32.xlu0 %v497, 121
        %v589 = vpop.permute.xlu0 %588
        %v594 = vadd.f32 %v578, %v583
        %v595 = vadd.f32 %v579, %v585
        %v596 = vadd.f32 %v580, %v587
        %v597 = vadd.f32 %v581, %v589
        %598 = vrot.lane.b32.xlu0 %v470, 120
        %v599 = vpop.permute.xlu0 %598
        %600 = vrot.lane.b32.xlu0 %v471, 120
        %v601 = vpop.permute.xlu0 %600
        %602 = vrot.lane.b32.xlu0 %v472, 120
        %v603 = vpop.permute.xlu0 %602
        %604 = vrot.lane.b32.xlu0 %v473, 120
        %v605 = vpop.permute.xlu0 %604
        %v610 = vadd.f32 %v594, %v599
        %v611 = vadd.f32 %v595, %v601
        %v612 = vadd.f32 %v596, %v603
        %v613 = vadd.f32 %v597, %v605
        %614 = vrot.lane.b32.xlu0 %v446, 119
        %v615 = vpop.permute.xlu0 %614
        %616 = vrot.lane.b32.xlu0 %v447, 119
        %v617 = vpop.permute.xlu0 %616
        %618 = vrot.lane.b32.xlu0 %v448, 119
        %v619 = vpop.permute.xlu0 %618
        %620 = vrot.lane.b32.xlu0 %v449, 119
        %v621 = vpop.permute.xlu0 %620
        %v626 = vadd.f32 %v610, %v615
        %v627 = vadd.f32 %v611, %v617
        %v628 = vadd.f32 %v612, %v619
        %v629 = vadd.f32 %v613, %v621
        %634 = vrot.lane.b32.xlu0 %v442, 118
        %v635 = vpop.permute.xlu0 %634
        %636 = vrot.lane.b32.xlu0 %v443, 118
        %v637 = vpop.permute.xlu0 %636
        %638 = vrot.lane.b32.xlu0 %v444, 118
        %v639 = vpop.permute.xlu0 %638
        %640 = vrot.lane.b32.xlu0 %v445, 118
        %v641 = vpop.permute.xlu0 %640
        %v646 = vadd.f32 %v626, %v635
        %v647 = vadd.f32 %v627, %v637
        %v648 = vadd.f32 %v628, %v639
        %v649 = vadd.f32 %v629, %v641
        %v650 = vmul.f32 %v646, 0.0010283802
        %v651 = vmul.f32 %v647, 0.0010283802
        %v652 = vmul.f32 %v646, 0.0075987587
        %v653 = vmul.f32 %v647, 0.0075987587
        %v654 = vmul.f32 %v648, 0.0075987587
        %vm658 = vcmask 1046528
        %v659 = vrot.slane %v652, 1
        %v660 = vrot.slane %v653, 1
        %v661 = vsel %vm658, %v659, %v660
        %v662 = vrot.slane %v654, 1
        %v663 = vsel %vm658, %v660, %v662
        %v666 = vadd.f32 %v650, %v661
        %v667 = vadd.f32 %v651, %v663
        %v668 = vmul.f32 %v646, 0.036000773
        %v669 = vmul.f32 %v647, 0.036000773
        %v670 = vmul.f32 %v648, 0.036000773
        %vm674 = vcmask 1045504
        %v675 = vrot.slane %v668, 2
        %v676 = vrot.slane %v669, 2
        %v677 = vsel %vm674, %v675, %v676
        %v678 = vrot.slane %v670, 2
        %v679 = vsel %vm674, %v676, %v678
        %v682 = vadd.f32 %v666, %v677
        %v683 = vadd.f32 %v667, %v679
        %v684 = vmul.f32 %v646, 0.109360695
        %v685 = vmul.f32 %v647, 0.109360695
        %v686 = vmul.f32 %v648, 0.109360695
        %vm690 = vcmask 1044480
        %v691 = vrot.slane %v684, 3
        %v692 = vrot.slane %v685, 3
        %v693 = vsel %vm690, %v691, %v692
        %v694 = vrot.slane %v686, 3
        %v695 = vsel %vm690, %v692, %v694
        %v698 = vadd.f32 %v682, %v693
        %v699 = vadd.f32 %v683, %v695
        %v700 = vmul.f32 %v646, 0.21300554
        %v701 = vmul.f32 %v647, 0.21300554
        %v702 = vmul.f32 %v648, 0.21300554
        %vm706 = vcmask 1043456
        %v707 = vrot.slane %v700, 4
        %v708 = vrot.slane %v701, 4
        %v709 = vsel %vm706, %v707, %v708
        %v710 = vrot.slane %v702, 4
        %v711 = vsel %vm706, %v708, %v710
        %v714 = vadd.f32 %v698, %v709
        %v715 = vadd.f32 %v699, %v711
        %v716 = vmul.f32 %v646, 0.26601174
        %v717 = vmul.f32 %v647, 0.26601174
        %v718 = vmul.f32 %v648, 0.26601174
        %vm722 = vcmask 1042432
        %v723 = vrot.slane %v716, 5
        %v724 = vrot.slane %v717, 5
        %v725 = vsel %vm722, %v723, %v724
        %v726 = vrot.slane %v718, 5
        %v727 = vsel %vm722, %v724, %v726
        %v730 = vadd.f32 %v714, %v725
        %v731 = vadd.f32 %v715, %v727
        %vm732 = vcmask 1041408
        %v733 = vrot.slane %v700, 6
        %v734 = vrot.slane %v701, 6
        %v735 = vsel %vm732, %v733, %v734
        %v736 = vrot.slane %v702, 6
        %v737 = vsel %vm732, %v734, %v736
        %v740 = vadd.f32 %v730, %v735
        %v741 = vadd.f32 %v731, %v737
        %vm742 = vcmask 1040384
        %v743 = vrot.slane %v684, 7
        %v744 = vrot.slane %v685, 7
        %v745 = vsel %vm742, %v743, %v744
        %v746 = vrot.slane %v686, 7
        %v747 = vsel %vm742, %v744, %v746
        %v750 = vadd.f32 %v740, %v745
        %v751 = vadd.f32 %v741, %v747
        %v752 = vadd.f32 %v750, %v669
        %v753 = vadd.f32 %v751, %v670
        %v754 = vmul.f32 %v649, 0.0075987587
        %v756 = vrot.slane %v754, 1
        %v757 = vsel %vm658, %v662, %v756
        %v759 = vadd.f32 %v752, %v663
        %v760 = vadd.f32 %v753, %v757
        %v761 = vmul.f32 %v648, 0.0010283802
        %v762 = vmul.f32 %v649, 0.0010283802
        %v766 = vrot.slane %v651, 2
        %v767 = vrot.slane %v761, 2
        %v768 = vsel %vm674, %v766, %v767
        %v769 = vrot.slane %v762, 2
        %v770 = vsel %vm674, %v767, %v769
        %v773 = vadd.f32 %v759, %v768
        %v774 = vadd.f32 %v760, %v770
        %v775 = vmul.f32 %v438, 0.0010283802
        %v776 = vmul.f32 %v439, 0.0010283802
        %v777 = vmul.f32 %v440, 0.0010283802
        %v778 = vmul.f32 %v441, 0.0010283802
        %v779 = vmul.f32 %v438, 0.0075987587
        %v780 = vmul.f32 %v439, 0.0075987587
        %v781 = vmul.f32 %v440, 0.0075987587
        %v782 = vmul.f32 %v441, 0.0075987587
        %787 = vrot.lane.b32.xlu0 %v779, 127
        %v788 = vpop.permute.xlu0 %787
        %789 = vrot.lane.b32.xlu0 %v780, 127
        %v790 = vpop.permute.xlu0 %789
        %791 = vrot.lane.b32.xlu0 %v781, 127
        %v792 = vpop.permute.xlu0 %791
        %793 = vrot.lane.b32.xlu0 %v782, 127
        %v794 = vpop.permute.xlu0 %793
        %v799 = vadd.f32 %v775, %v788
        %v800 = vadd.f32 %v776, %v790
        %v801 = vadd.f32 %v777, %v792
        %v802 = vadd.f32 %v778, %v794
        %v803 = vmul.f32 %v438, 0.036000773
        %v804 = vmul.f32 %v439, 0.036000773
        %v805 = vmul.f32 %v440, 0.036000773
        %v806 = vmul.f32 %v441, 0.036000773
        %811 = vrot.lane.b32.xlu0 %v803, 126
        %v812 = vpop.permute.xlu0 %811
        %813 = vrot.lane.b32.xlu0 %v804, 126
        %v814 = vpop.permute.xlu0 %813
        %815 = vrot.lane.b32.xlu0 %v805, 126
        %v816 = vpop.permute.xlu0 %815
        %817 = vrot.lane.b32.xlu0 %v806, 126
        %v818 = vpop.permute.xlu0 %817
        %v823 = vadd.f32 %v799, %v812
        %v824 = vadd.f32 %v800, %v814
        %v825 = vadd.f32 %v801, %v816
        %v826 = vadd.f32 %v802, %v818
        %v827 = vmul.f32 %v438, 0.109360695
        %v828 = vmul.f32 %v439, 0.109360695
        %v829 = vmul.f32 %v440, 0.109360695
        %v830 = vmul.f32 %v441, 0.109360695
        %835 = vrot.lane.b32.xlu0 %v827, 125
        %v836 = vpop.permute.xlu0 %835
        %837 = vrot.lane.b32.xlu0 %v828, 125
        %v838 = vpop.permute.xlu0 %837
        %839 = vrot.lane.b32.xlu0 %v829, 125
        %v840 = vpop.permute.xlu0 %839
        %841 = vrot.lane.b32.xlu0 %v830, 125
        %v842 = vpop.permute.xlu0 %841
        %v847 = vadd.f32 %v823, %v836
        %v848 = vadd.f32 %v824, %v838
        %v849 = vadd.f32 %v825, %v840
        %v850 = vadd.f32 %v826, %v842
        %v851 = vmul.f32 %v438, 0.21300554
        %v852 = vmul.f32 %v439, 0.21300554
        %v853 = vmul.f32 %v440, 0.21300554
        %v854 = vmul.f32 %v441, 0.21300554
        %859 = vrot.lane.b32.xlu0 %v851, 124
        %v860 = vpop.permute.xlu0 %859
        %861 = vrot.lane.b32.xlu0 %v852, 124
        %v862 = vpop.permute.xlu0 %861
        %863 = vrot.lane.b32.xlu0 %v853, 124
        %v864 = vpop.permute.xlu0 %863
        %865 = vrot.lane.b32.xlu0 %v854, 124
        %v866 = vpop.permute.xlu0 %865
        %v871 = vadd.f32 %v847, %v860
        %v872 = vadd.f32 %v848, %v862
        %v873 = vadd.f32 %v849, %v864
        %v874 = vadd.f32 %v850, %v866
        %v875 = vmul.f32 %v438, 0.26601174
        %v876 = vmul.f32 %v439, 0.26601174
        %v877 = vmul.f32 %v440, 0.26601174
        %v878 = vmul.f32 %v441, 0.26601174
        %883 = vrot.lane.b32.xlu0 %v875, 123
        %v884 = vpop.permute.xlu0 %883
        %885 = vrot.lane.b32.xlu0 %v876, 123
        %v886 = vpop.permute.xlu0 %885
        %887 = vrot.lane.b32.xlu0 %v877, 123
        %v888 = vpop.permute.xlu0 %887
        %889 = vrot.lane.b32.xlu0 %v878, 123
        %v890 = vpop.permute.xlu0 %889
        %v895 = vadd.f32 %v871, %v884
        %v896 = vadd.f32 %v872, %v886
        %v897 = vadd.f32 %v873, %v888
        %v898 = vadd.f32 %v874, %v890
        %899 = vrot.lane.b32.xlu0 %v851, 122
        %v900 = vpop.permute.xlu0 %899
        %901 = vrot.lane.b32.xlu0 %v852, 122
        %v902 = vpop.permute.xlu0 %901
        %903 = vrot.lane.b32.xlu0 %v853, 122
        %v904 = vpop.permute.xlu0 %903
        %905 = vrot.lane.b32.xlu0 %v854, 122
        %v906 = vpop.permute.xlu0 %905
        %v911 = vadd.f32 %v895, %v900
        %v912 = vadd.f32 %v896, %v902
        %v913 = vadd.f32 %v897, %v904
        %v914 = vadd.f32 %v898, %v906
        %915 = vrot.lane.b32.xlu0 %v827, 121
        %v916 = vpop.permute.xlu0 %915
        %917 = vrot.lane.b32.xlu0 %v828, 121
        %v918 = vpop.permute.xlu0 %917
        %919 = vrot.lane.b32.xlu0 %v829, 121
        %v920 = vpop.permute.xlu0 %919
        %921 = vrot.lane.b32.xlu0 %v830, 121
        %v922 = vpop.permute.xlu0 %921
        %v927 = vadd.f32 %v911, %v916
        %v928 = vadd.f32 %v912, %v918
        %v929 = vadd.f32 %v913, %v920
        %v930 = vadd.f32 %v914, %v922
        %931 = vrot.lane.b32.xlu0 %v803, 120
        %v932 = vpop.permute.xlu0 %931
        %933 = vrot.lane.b32.xlu0 %v804, 120
        %v934 = vpop.permute.xlu0 %933
        %935 = vrot.lane.b32.xlu0 %v805, 120
        %v936 = vpop.permute.xlu0 %935
        %937 = vrot.lane.b32.xlu0 %v806, 120
        %v938 = vpop.permute.xlu0 %937
        %v943 = vadd.f32 %v927, %v932
        %v944 = vadd.f32 %v928, %v934
        %v945 = vadd.f32 %v929, %v936
        %v946 = vadd.f32 %v930, %v938
        %947 = vrot.lane.b32.xlu0 %v779, 119
        %v948 = vpop.permute.xlu0 %947
        %949 = vrot.lane.b32.xlu0 %v780, 119
        %v950 = vpop.permute.xlu0 %949
        %951 = vrot.lane.b32.xlu0 %v781, 119
        %v952 = vpop.permute.xlu0 %951
        %953 = vrot.lane.b32.xlu0 %v782, 119
        %v954 = vpop.permute.xlu0 %953
        %v959 = vadd.f32 %v943, %v948
        %v960 = vadd.f32 %v944, %v950
        %v961 = vadd.f32 %v945, %v952
        %v962 = vadd.f32 %v946, %v954
        %967 = vrot.lane.b32.xlu0 %v775, 118
        %v968 = vpop.permute.xlu0 %967
        %969 = vrot.lane.b32.xlu0 %v776, 118
        %v970 = vpop.permute.xlu0 %969
        %971 = vrot.lane.b32.xlu0 %v777, 118
        %v972 = vpop.permute.xlu0 %971
        %973 = vrot.lane.b32.xlu0 %v778, 118
        %v974 = vpop.permute.xlu0 %973
        %v979 = vadd.f32 %v959, %v968
        %v980 = vadd.f32 %v960, %v970
        %v981 = vadd.f32 %v961, %v972
        %v982 = vadd.f32 %v962, %v974
        %v983 = vmul.f32 %v979, 0.0010283802
        %v984 = vmul.f32 %v980, 0.0010283802
        %v985 = vmul.f32 %v979, 0.0075987587
        %v986 = vmul.f32 %v980, 0.0075987587
        %v987 = vmul.f32 %v981, 0.0075987587
        %v991 = vrot.slane %v985, 1
        %v992 = vrot.slane %v986, 1
        %v993 = vsel %vm658, %v991, %v992
        %v994 = vrot.slane %v987, 1
        %v995 = vsel %vm658, %v992, %v994
        %v998 = vadd.f32 %v983, %v993
        %v999 = vadd.f32 %v984, %v995
        %v1000 = vmul.f32 %v979, 0.036000773
        %v1001 = vmul.f32 %v980, 0.036000773
        %v1002 = vmul.f32 %v981, 0.036000773
        %v1006 = vrot.slane %v1000, 2
        %v1007 = vrot.slane %v1001, 2
        %v1008 = vsel %vm674, %v1006, %v1007
        %v1009 = vrot.slane %v1002, 2
        %v1010 = vsel %vm674, %v1007, %v1009
        %v1013 = vadd.f32 %v998, %v1008
        %v1014 = vadd.f32 %v999, %v1010
        %v1015 = vmul.f32 %v979, 0.109360695
        %v1016 = vmul.f32 %v980, 0.109360695
        %v1017 = vmul.f32 %v981, 0.109360695
        %v1021 = vrot.slane %v1015, 3
        %v1022 = vrot.slane %v1016, 3
        %v1023 = vsel %vm690, %v1021, %v1022
        %v1024 = vrot.slane %v1017, 3
        %v1025 = vsel %vm690, %v1022, %v1024
        %v1028 = vadd.f32 %v1013, %v1023
        %v1029 = vadd.f32 %v1014, %v1025
        %v1030 = vmul.f32 %v979, 0.21300554
        %v1031 = vmul.f32 %v980, 0.21300554
        %v1032 = vmul.f32 %v981, 0.21300554
        %v1036 = vrot.slane %v1030, 4
        %v1037 = vrot.slane %v1031, 4
        %v1038 = vsel %vm706, %v1036, %v1037
        %v1039 = vrot.slane %v1032, 4
        %v1040 = vsel %vm706, %v1037, %v1039
        %v1043 = vadd.f32 %v1028, %v1038
        %v1044 = vadd.f32 %v1029, %v1040
        %v1045 = vmul.f32 %v979, 0.26601174
        %v1046 = vmul.f32 %v980, 0.26601174
        %v1047 = vmul.f32 %v981, 0.26601174
        %v1051 = vrot.slane %v1045, 5
        %v1052 = vrot.slane %v1046, 5
        %v1053 = vsel %vm722, %v1051, %v1052
        %v1054 = vrot.slane %v1047, 5
        %v1055 = vsel %vm722, %v1052, %v1054
        %v1058 = vadd.f32 %v1043, %v1053
        %v1059 = vadd.f32 %v1044, %v1055
        %v1060 = vrot.slane %v1030, 6
        %v1061 = vrot.slane %v1031, 6
        %v1062 = vsel %vm732, %v1060, %v1061
        %v1063 = vrot.slane %v1032, 6
        %v1064 = vsel %vm732, %v1061, %v1063
        %v1067 = vadd.f32 %v1058, %v1062
        %v1068 = vadd.f32 %v1059, %v1064
        %v1069 = vrot.slane %v1015, 7
        %v1070 = vrot.slane %v1016, 7
        %v1071 = vsel %vm742, %v1069, %v1070
        %v1072 = vrot.slane %v1017, 7
        %v1073 = vsel %vm742, %v1070, %v1072
        %v1076 = vadd.f32 %v1067, %v1071
        %v1077 = vadd.f32 %v1068, %v1073
        %v1078 = vadd.f32 %v1076, %v1001
        %v1079 = vadd.f32 %v1077, %v1002
        %v1080 = vmul.f32 %v982, 0.0075987587
        %v1082 = vrot.slane %v1080, 1
        %v1083 = vsel %vm658, %v994, %v1082
        %v1085 = vadd.f32 %v1078, %v995
        %v1086 = vadd.f32 %v1079, %v1083
        %v1087 = vmul.f32 %v981, 0.0010283802
        %v1088 = vmul.f32 %v982, 0.0010283802
        %v1092 = vrot.slane %v984, 2
        %v1093 = vrot.slane %v1087, 2
        %v1094 = vsel %vm674, %v1092, %v1093
        %v1095 = vrot.slane %v1088, 2
        %v1096 = vsel %vm674, %v1093, %v1095
        %v1099 = vadd.f32 %v1085, %v1094
        %v1100 = vadd.f32 %v1086, %v1096
        %v1101 = vmul.f32 %v434, %v434
        %v1102 = vmul.f32 %v435, %v435
        %v1103 = vmul.f32 %v436, %v436
        %v1104 = vmul.f32 %v437, %v437
        %v1105 = vmul.f32 %v1101, 0.0010283802
        %v1106 = vmul.f32 %v1102, 0.0010283802
        %v1107 = vmul.f32 %v1103, 0.0010283802
        %v1108 = vmul.f32 %v1104, 0.0010283802
        %v1109 = vmul.f32 %v1101, 0.0075987587
        %v1110 = vmul.f32 %v1102, 0.0075987587
        %v1111 = vmul.f32 %v1103, 0.0075987587
        %v1112 = vmul.f32 %v1104, 0.0075987587
        %1117 = vrot.lane.b32.xlu0 %v1109, 127
        %v1118 = vpop.permute.xlu0 %1117
        %1119 = vrot.lane.b32.xlu0 %v1110, 127
        %v1120 = vpop.permute.xlu0 %1119
        %1121 = vrot.lane.b32.xlu0 %v1111, 127
        %v1122 = vpop.permute.xlu0 %1121
        %1123 = vrot.lane.b32.xlu0 %v1112, 127
        %v1124 = vpop.permute.xlu0 %1123
        %v1129 = vadd.f32 %v1105, %v1118
        %v1130 = vadd.f32 %v1106, %v1120
        %v1131 = vadd.f32 %v1107, %v1122
        %v1132 = vadd.f32 %v1108, %v1124
        %v1133 = vmul.f32 %v1101, 0.036000773
        %v1134 = vmul.f32 %v1102, 0.036000773
        %v1135 = vmul.f32 %v1103, 0.036000773
        %v1136 = vmul.f32 %v1104, 0.036000773
        %1141 = vrot.lane.b32.xlu0 %v1133, 126
        %v1142 = vpop.permute.xlu0 %1141
        %1143 = vrot.lane.b32.xlu0 %v1134, 126
        %v1144 = vpop.permute.xlu0 %1143
        %1145 = vrot.lane.b32.xlu0 %v1135, 126
        %v1146 = vpop.permute.xlu0 %1145
        %1147 = vrot.lane.b32.xlu0 %v1136, 126
        %v1148 = vpop.permute.xlu0 %1147
        %v1153 = vadd.f32 %v1129, %v1142
        %v1154 = vadd.f32 %v1130, %v1144
        %v1155 = vadd.f32 %v1131, %v1146
        %v1156 = vadd.f32 %v1132, %v1148
        %v1157 = vmul.f32 %v1101, 0.109360695
        %v1158 = vmul.f32 %v1102, 0.109360695
        %v1159 = vmul.f32 %v1103, 0.109360695
        %v1160 = vmul.f32 %v1104, 0.109360695
        %1165 = vrot.lane.b32.xlu0 %v1157, 125
        %v1166 = vpop.permute.xlu0 %1165
        %1167 = vrot.lane.b32.xlu0 %v1158, 125
        %v1168 = vpop.permute.xlu0 %1167
        %1169 = vrot.lane.b32.xlu0 %v1159, 125
        %v1170 = vpop.permute.xlu0 %1169
        %1171 = vrot.lane.b32.xlu0 %v1160, 125
        %v1172 = vpop.permute.xlu0 %1171
        %v1177 = vadd.f32 %v1153, %v1166
        %v1178 = vadd.f32 %v1154, %v1168
        %v1179 = vadd.f32 %v1155, %v1170
        %v1180 = vadd.f32 %v1156, %v1172
        %v1181 = vmul.f32 %v1101, 0.21300554
        %v1182 = vmul.f32 %v1102, 0.21300554
        %v1183 = vmul.f32 %v1103, 0.21300554
        %v1184 = vmul.f32 %v1104, 0.21300554
        %1189 = vrot.lane.b32.xlu0 %v1181, 124
        %v1190 = vpop.permute.xlu0 %1189
        %1191 = vrot.lane.b32.xlu0 %v1182, 124
        %v1192 = vpop.permute.xlu0 %1191
        %1193 = vrot.lane.b32.xlu0 %v1183, 124
        %v1194 = vpop.permute.xlu0 %1193
        %1195 = vrot.lane.b32.xlu0 %v1184, 124
        %v1196 = vpop.permute.xlu0 %1195
        %v1201 = vadd.f32 %v1177, %v1190
        %v1202 = vadd.f32 %v1178, %v1192
        %v1203 = vadd.f32 %v1179, %v1194
        %v1204 = vadd.f32 %v1180, %v1196
        %v1205 = vmul.f32 %v1101, 0.26601174
        %v1206 = vmul.f32 %v1102, 0.26601174
        %v1207 = vmul.f32 %v1103, 0.26601174
        %v1208 = vmul.f32 %v1104, 0.26601174
        %1213 = vrot.lane.b32.xlu0 %v1205, 123
        %v1214 = vpop.permute.xlu0 %1213
        %1215 = vrot.lane.b32.xlu0 %v1206, 123
        %v1216 = vpop.permute.xlu0 %1215
        %1217 = vrot.lane.b32.xlu0 %v1207, 123
        %v1218 = vpop.permute.xlu0 %1217
        %1219 = vrot.lane.b32.xlu0 %v1208, 123
        %v1220 = vpop.permute.xlu0 %1219
        %v1225 = vadd.f32 %v1201, %v1214
        %v1226 = vadd.f32 %v1202, %v1216
        %v1227 = vadd.f32 %v1203, %v1218
        %v1228 = vadd.f32 %v1204, %v1220
        %1229 = vrot.lane.b32.xlu0 %v1181, 122
        %v1230 = vpop.permute.xlu0 %1229
        %1231 = vrot.lane.b32.xlu0 %v1182, 122
        %v1232 = vpop.permute.xlu0 %1231
        %1233 = vrot.lane.b32.xlu0 %v1183, 122
        %v1234 = vpop.permute.xlu0 %1233
        %1235 = vrot.lane.b32.xlu0 %v1184, 122
        %v1236 = vpop.permute.xlu0 %1235
        %v1241 = vadd.f32 %v1225, %v1230
        %v1242 = vadd.f32 %v1226, %v1232
        %v1243 = vadd.f32 %v1227, %v1234
        %v1244 = vadd.f32 %v1228, %v1236
        %1245 = vrot.lane.b32.xlu0 %v1157, 121
        %v1246 = vpop.permute.xlu0 %1245
        %1247 = vrot.lane.b32.xlu0 %v1158, 121
        %v1248 = vpop.permute.xlu0 %1247
        %1249 = vrot.lane.b32.xlu0 %v1159, 121
        %v1250 = vpop.permute.xlu0 %1249
        %1251 = vrot.lane.b32.xlu0 %v1160, 121
        %v1252 = vpop.permute.xlu0 %1251
        %v1257 = vadd.f32 %v1241, %v1246
        %v1258 = vadd.f32 %v1242, %v1248
        %v1259 = vadd.f32 %v1243, %v1250
        %v1260 = vadd.f32 %v1244, %v1252
        %1261 = vrot.lane.b32.xlu0 %v1133, 120
        %v1262 = vpop.permute.xlu0 %1261
        %1263 = vrot.lane.b32.xlu0 %v1134, 120
        %v1264 = vpop.permute.xlu0 %1263
        %1265 = vrot.lane.b32.xlu0 %v1135, 120
        %v1266 = vpop.permute.xlu0 %1265
        %1267 = vrot.lane.b32.xlu0 %v1136, 120
        %v1268 = vpop.permute.xlu0 %1267
        %v1273 = vadd.f32 %v1257, %v1262
        %v1274 = vadd.f32 %v1258, %v1264
        %v1275 = vadd.f32 %v1259, %v1266
        %v1276 = vadd.f32 %v1260, %v1268
        %1277 = vrot.lane.b32.xlu0 %v1109, 119
        %v1278 = vpop.permute.xlu0 %1277
        %1279 = vrot.lane.b32.xlu0 %v1110, 119
        %v1280 = vpop.permute.xlu0 %1279
        %1281 = vrot.lane.b32.xlu0 %v1111, 119
        %v1282 = vpop.permute.xlu0 %1281
        %1283 = vrot.lane.b32.xlu0 %v1112, 119
        %v1284 = vpop.permute.xlu0 %1283
        %v1289 = vadd.f32 %v1273, %v1278
        %v1290 = vadd.f32 %v1274, %v1280
        %v1291 = vadd.f32 %v1275, %v1282
        %v1292 = vadd.f32 %v1276, %v1284
        %1297 = vrot.lane.b32.xlu0 %v1105, 118
        %v1298 = vpop.permute.xlu0 %1297
        %1299 = vrot.lane.b32.xlu0 %v1106, 118
        %v1300 = vpop.permute.xlu0 %1299
        %1301 = vrot.lane.b32.xlu0 %v1107, 118
        %v1302 = vpop.permute.xlu0 %1301
        %1303 = vrot.lane.b32.xlu0 %v1108, 118
        %v1304 = vpop.permute.xlu0 %1303
        %v1309 = vadd.f32 %v1289, %v1298
        %v1310 = vadd.f32 %v1290, %v1300
        %v1311 = vadd.f32 %v1291, %v1302
        %v1312 = vadd.f32 %v1292, %v1304
        %v1313 = vmul.f32 %v1309, 0.0010283802
        %v1314 = vmul.f32 %v1310, 0.0010283802
        %v1315 = vmul.f32 %v1309, 0.0075987587
        %v1316 = vmul.f32 %v1310, 0.0075987587
        %v1317 = vmul.f32 %v1311, 0.0075987587
        %v1321 = vrot.slane %v1315, 1
        %v1322 = vrot.slane %v1316, 1
        %v1323 = vsel %vm658, %v1321, %v1322
        %v1324 = vrot.slane %v1317, 1
        %v1325 = vsel %vm658, %v1322, %v1324
        %v1328 = vadd.f32 %v1313, %v1323
        %v1329 = vadd.f32 %v1314, %v1325
        %v1330 = vmul.f32 %v1309, 0.036000773
        %v1331 = vmul.f32 %v1310, 0.036000773
        %v1332 = vmul.f32 %v1311, 0.036000773
        %v1336 = vrot.slane %v1330, 2
        %v1337 = vrot.slane %v1331, 2
        %v1338 = vsel %vm674, %v1336, %v1337
        %v1339 = vrot.slane %v1332, 2
        %v1340 = vsel %vm674, %v1337, %v1339
        %v1343 = vadd.f32 %v1328, %v1338
        %v1344 = vadd.f32 %v1329, %v1340
        %v1345 = vmul.f32 %v1309, 0.109360695
        %v1346 = vmul.f32 %v1310, 0.109360695
        %v1347 = vmul.f32 %v1311, 0.109360695
        %v1351 = vrot.slane %v1345, 3
        %v1352 = vrot.slane %v1346, 3
        %v1353 = vsel %vm690, %v1351, %v1352
        %v1354 = vrot.slane %v1347, 3
        %v1355 = vsel %vm690, %v1352, %v1354
        %v1358 = vadd.f32 %v1343, %v1353
        %v1359 = vadd.f32 %v1344, %v1355
        %v1360 = vmul.f32 %v1309, 0.21300554
        %v1361 = vmul.f32 %v1310, 0.21300554
        %v1362 = vmul.f32 %v1311, 0.21300554
        %v1366 = vrot.slane %v1360, 4
        %v1367 = vrot.slane %v1361, 4
        %v1368 = vsel %vm706, %v1366, %v1367
        %v1369 = vrot.slane %v1362, 4
        %v1370 = vsel %vm706, %v1367, %v1369
        %v1373 = vadd.f32 %v1358, %v1368
        %v1374 = vadd.f32 %v1359, %v1370
        %v1375 = vmul.f32 %v1309, 0.26601174
        %v1376 = vmul.f32 %v1310, 0.26601174
        %v1377 = vmul.f32 %v1311, 0.26601174
        %v1381 = vrot.slane %v1375, 5
        %v1382 = vrot.slane %v1376, 5
        %v1383 = vsel %vm722, %v1381, %v1382
        %v1384 = vrot.slane %v1377, 5
        %v1385 = vsel %vm722, %v1382, %v1384
        %v1388 = vadd.f32 %v1373, %v1383
        %v1389 = vadd.f32 %v1374, %v1385
        %v1390 = vrot.slane %v1360, 6
        %v1391 = vrot.slane %v1361, 6
        %v1392 = vsel %vm732, %v1390, %v1391
        %v1393 = vrot.slane %v1362, 6
        %v1394 = vsel %vm732, %v1391, %v1393
        %v1397 = vadd.f32 %v1388, %v1392
        %v1398 = vadd.f32 %v1389, %v1394
        %v1399 = vrot.slane %v1345, 7
        %v1400 = vrot.slane %v1346, 7
        %v1401 = vsel %vm742, %v1399, %v1400
        %v1402 = vrot.slane %v1347, 7
        %v1403 = vsel %vm742, %v1400, %v1402
        %v1406 = vadd.f32 %v1397, %v1401
        %v1407 = vadd.f32 %v1398, %v1403
        %v1408 = vadd.f32 %v1406, %v1331
        %v1409 = vadd.f32 %v1407, %v1332
        %v1410 = vmul.f32 %v1312, 0.0075987587
        %v1412 = vrot.slane %v1410, 1
        %v1413 = vsel %vm658, %v1324, %v1412
        %v1415 = vadd.f32 %v1408, %v1325
        %v1416 = vadd.f32 %v1409, %v1413
        %v1417 = vmul.f32 %v1311, 0.0010283802
        %v1418 = vmul.f32 %v1312, 0.0010283802
        %v1422 = vrot.slane %v1314, 2
        %v1423 = vrot.slane %v1417, 2
        %v1424 = vsel %vm674, %v1422, %v1423
        %v1425 = vrot.slane %v1418, 2
        %v1426 = vsel %vm674, %v1423, %v1425
        %v1429 = vadd.f32 %v1415, %v1424
        %v1430 = vadd.f32 %v1416, %v1426
        %v1431 = vmul.f32 %v438, %v438
        %v1432 = vmul.f32 %v439, %v439
        %v1433 = vmul.f32 %v440, %v440
        %v1434 = vmul.f32 %v441, %v441
        %v1435 = vmul.f32 %v1431, 0.0010283802
        %v1436 = vmul.f32 %v1432, 0.0010283802
        %v1437 = vmul.f32 %v1433, 0.0010283802
        %v1438 = vmul.f32 %v1434, 0.0010283802
        %v1439 = vmul.f32 %v1431, 0.0075987587
        %v1440 = vmul.f32 %v1432, 0.0075987587
        %v1441 = vmul.f32 %v1433, 0.0075987587
        %v1442 = vmul.f32 %v1434, 0.0075987587
        %1447 = vrot.lane.b32.xlu0 %v1439, 127
        %v1448 = vpop.permute.xlu0 %1447
        %1449 = vrot.lane.b32.xlu0 %v1440, 127
        %v1450 = vpop.permute.xlu0 %1449
        %1451 = vrot.lane.b32.xlu0 %v1441, 127
        %v1452 = vpop.permute.xlu0 %1451
        %1453 = vrot.lane.b32.xlu0 %v1442, 127
        %v1454 = vpop.permute.xlu0 %1453
        %v1459 = vadd.f32 %v1435, %v1448
        %v1460 = vadd.f32 %v1436, %v1450
        %v1461 = vadd.f32 %v1437, %v1452
        %v1462 = vadd.f32 %v1438, %v1454
        %v1463 = vmul.f32 %v1431, 0.036000773
        %v1464 = vmul.f32 %v1432, 0.036000773
        %v1465 = vmul.f32 %v1433, 0.036000773
        %v1466 = vmul.f32 %v1434, 0.036000773
        %1471 = vrot.lane.b32.xlu0 %v1463, 126
        %v1472 = vpop.permute.xlu0 %1471
        %1473 = vrot.lane.b32.xlu0 %v1464, 126
        %v1474 = vpop.permute.xlu0 %1473
        %1475 = vrot.lane.b32.xlu0 %v1465, 126
        %v1476 = vpop.permute.xlu0 %1475
        %1477 = vrot.lane.b32.xlu0 %v1466, 126
        %v1478 = vpop.permute.xlu0 %1477
        %v1483 = vadd.f32 %v1459, %v1472
        %v1484 = vadd.f32 %v1460, %v1474
        %v1485 = vadd.f32 %v1461, %v1476
        %v1486 = vadd.f32 %v1462, %v1478
        %v1487 = vmul.f32 %v1431, 0.109360695
        %v1488 = vmul.f32 %v1432, 0.109360695
        %v1489 = vmul.f32 %v1433, 0.109360695
        %v1490 = vmul.f32 %v1434, 0.109360695
        %1495 = vrot.lane.b32.xlu0 %v1487, 125
        %v1496 = vpop.permute.xlu0 %1495
        %1497 = vrot.lane.b32.xlu0 %v1488, 125
        %v1498 = vpop.permute.xlu0 %1497
        %1499 = vrot.lane.b32.xlu0 %v1489, 125
        %v1500 = vpop.permute.xlu0 %1499
        %1501 = vrot.lane.b32.xlu0 %v1490, 125
        %v1502 = vpop.permute.xlu0 %1501
        %v1507 = vadd.f32 %v1483, %v1496
        %v1508 = vadd.f32 %v1484, %v1498
        %v1509 = vadd.f32 %v1485, %v1500
        %v1510 = vadd.f32 %v1486, %v1502
        %v1511 = vmul.f32 %v1431, 0.21300554
        %v1512 = vmul.f32 %v1432, 0.21300554
        %v1513 = vmul.f32 %v1433, 0.21300554
        %v1514 = vmul.f32 %v1434, 0.21300554
        %1519 = vrot.lane.b32.xlu0 %v1511, 124
        %v1520 = vpop.permute.xlu0 %1519
        %1521 = vrot.lane.b32.xlu0 %v1512, 124
        %v1522 = vpop.permute.xlu0 %1521
        %1523 = vrot.lane.b32.xlu0 %v1513, 124
        %v1524 = vpop.permute.xlu0 %1523
        %1525 = vrot.lane.b32.xlu0 %v1514, 124
        %v1526 = vpop.permute.xlu0 %1525
        %v1531 = vadd.f32 %v1507, %v1520
        %v1532 = vadd.f32 %v1508, %v1522
        %v1533 = vadd.f32 %v1509, %v1524
        %v1534 = vadd.f32 %v1510, %v1526
        %v1535 = vmul.f32 %v1431, 0.26601174
        %v1536 = vmul.f32 %v1432, 0.26601174
        %v1537 = vmul.f32 %v1433, 0.26601174
        %v1538 = vmul.f32 %v1434, 0.26601174
        %1543 = vrot.lane.b32.xlu0 %v1535, 123
        %v1544 = vpop.permute.xlu0 %1543
        %1545 = vrot.lane.b32.xlu0 %v1536, 123
        %v1546 = vpop.permute.xlu0 %1545
        %1547 = vrot.lane.b32.xlu0 %v1537, 123
        %v1548 = vpop.permute.xlu0 %1547
        %1549 = vrot.lane.b32.xlu0 %v1538, 123
        %v1550 = vpop.permute.xlu0 %1549
        %v1555 = vadd.f32 %v1531, %v1544
        %v1556 = vadd.f32 %v1532, %v1546
        %v1557 = vadd.f32 %v1533, %v1548
        %v1558 = vadd.f32 %v1534, %v1550
        %1559 = vrot.lane.b32.xlu0 %v1511, 122
        %v1560 = vpop.permute.xlu0 %1559
        %1561 = vrot.lane.b32.xlu0 %v1512, 122
        %v1562 = vpop.permute.xlu0 %1561
        %1563 = vrot.lane.b32.xlu0 %v1513, 122
        %v1564 = vpop.permute.xlu0 %1563
        %1565 = vrot.lane.b32.xlu0 %v1514, 122
        %v1566 = vpop.permute.xlu0 %1565
        %v1571 = vadd.f32 %v1555, %v1560
        %v1572 = vadd.f32 %v1556, %v1562
        %v1573 = vadd.f32 %v1557, %v1564
        %v1574 = vadd.f32 %v1558, %v1566
        %1575 = vrot.lane.b32.xlu0 %v1487, 121
        %v1576 = vpop.permute.xlu0 %1575
        %1577 = vrot.lane.b32.xlu0 %v1488, 121
        %v1578 = vpop.permute.xlu0 %1577
        %1579 = vrot.lane.b32.xlu0 %v1489, 121
        %v1580 = vpop.permute.xlu0 %1579
        %1581 = vrot.lane.b32.xlu0 %v1490, 121
        %v1582 = vpop.permute.xlu0 %1581
        %v1587 = vadd.f32 %v1571, %v1576
        %v1588 = vadd.f32 %v1572, %v1578
        %v1589 = vadd.f32 %v1573, %v1580
        %v1590 = vadd.f32 %v1574, %v1582
        %1591 = vrot.lane.b32.xlu0 %v1463, 120
        %v1592 = vpop.permute.xlu0 %1591
        %1593 = vrot.lane.b32.xlu0 %v1464, 120
        %v1594 = vpop.permute.xlu0 %1593
        %1595 = vrot.lane.b32.xlu0 %v1465, 120
        %v1596 = vpop.permute.xlu0 %1595
        %1597 = vrot.lane.b32.xlu0 %v1466, 120
        %v1598 = vpop.permute.xlu0 %1597
        %v1603 = vadd.f32 %v1587, %v1592
        %v1604 = vadd.f32 %v1588, %v1594
        %v1605 = vadd.f32 %v1589, %v1596
        %v1606 = vadd.f32 %v1590, %v1598
        %1607 = vrot.lane.b32.xlu0 %v1439, 119
        %v1608 = vpop.permute.xlu0 %1607
        %1609 = vrot.lane.b32.xlu0 %v1440, 119
        %v1610 = vpop.permute.xlu0 %1609
        %1611 = vrot.lane.b32.xlu0 %v1441, 119
        %v1612 = vpop.permute.xlu0 %1611
        %1613 = vrot.lane.b32.xlu0 %v1442, 119
        %v1614 = vpop.permute.xlu0 %1613
        %v1619 = vadd.f32 %v1603, %v1608
        %v1620 = vadd.f32 %v1604, %v1610
        %v1621 = vadd.f32 %v1605, %v1612
        %v1622 = vadd.f32 %v1606, %v1614
        %1627 = vrot.lane.b32.xlu0 %v1435, 118
        %v1628 = vpop.permute.xlu0 %1627
        %1629 = vrot.lane.b32.xlu0 %v1436, 118
        %v1630 = vpop.permute.xlu0 %1629
        %1631 = vrot.lane.b32.xlu0 %v1437, 118
        %v1632 = vpop.permute.xlu0 %1631
        %1633 = vrot.lane.b32.xlu0 %v1438, 118
        %v1634 = vpop.permute.xlu0 %1633
        %v1639 = vadd.f32 %v1619, %v1628
        %v1640 = vadd.f32 %v1620, %v1630
        %v1641 = vadd.f32 %v1621, %v1632
        %v1642 = vadd.f32 %v1622, %v1634
        %v1643 = vmul.f32 %v1639, 0.0010283802
        %v1644 = vmul.f32 %v1640, 0.0010283802
        %v1645 = vmul.f32 %v1639, 0.0075987587
        %v1646 = vmul.f32 %v1640, 0.0075987587
        %v1647 = vmul.f32 %v1641, 0.0075987587
        %v1651 = vrot.slane %v1645, 1
        %v1652 = vrot.slane %v1646, 1
        %v1653 = vsel %vm658, %v1651, %v1652
        %v1654 = vrot.slane %v1647, 1
        %v1655 = vsel %vm658, %v1652, %v1654
        %v1658 = vadd.f32 %v1643, %v1653
        %v1659 = vadd.f32 %v1644, %v1655
        %v1660 = vmul.f32 %v1639, 0.036000773
        %v1661 = vmul.f32 %v1640, 0.036000773
        %v1662 = vmul.f32 %v1641, 0.036000773
        %v1666 = vrot.slane %v1660, 2
        %v1667 = vrot.slane %v1661, 2
        %v1668 = vsel %vm674, %v1666, %v1667
        %v1669 = vrot.slane %v1662, 2
        %v1670 = vsel %vm674, %v1667, %v1669
        %v1673 = vadd.f32 %v1658, %v1668
        %v1674 = vadd.f32 %v1659, %v1670
        %v1675 = vmul.f32 %v1639, 0.109360695
        %v1676 = vmul.f32 %v1640, 0.109360695
        %v1677 = vmul.f32 %v1641, 0.109360695
        %v1681 = vrot.slane %v1675, 3
        %v1682 = vrot.slane %v1676, 3
        %v1683 = vsel %vm690, %v1681, %v1682
        %v1684 = vrot.slane %v1677, 3
        %v1685 = vsel %vm690, %v1682, %v1684
        %v1688 = vadd.f32 %v1673, %v1683
        %v1689 = vadd.f32 %v1674, %v1685
        %v1690 = vmul.f32 %v1639, 0.21300554
        %v1691 = vmul.f32 %v1640, 0.21300554
        %v1692 = vmul.f32 %v1641, 0.21300554
        %v1696 = vrot.slane %v1690, 4
        %v1697 = vrot.slane %v1691, 4
        %v1698 = vsel %vm706, %v1696, %v1697
        %v1699 = vrot.slane %v1692, 4
        %v1700 = vsel %vm706, %v1697, %v1699
        %v1703 = vadd.f32 %v1688, %v1698
        %v1704 = vadd.f32 %v1689, %v1700
        %v1705 = vmul.f32 %v1639, 0.26601174
        %v1706 = vmul.f32 %v1640, 0.26601174
        %v1707 = vmul.f32 %v1641, 0.26601174
        %v1711 = vrot.slane %v1705, 5
        %v1712 = vrot.slane %v1706, 5
        %v1713 = vsel %vm722, %v1711, %v1712
        %v1714 = vrot.slane %v1707, 5
        %v1715 = vsel %vm722, %v1712, %v1714
        %v1718 = vadd.f32 %v1703, %v1713
        %v1719 = vadd.f32 %v1704, %v1715
        %v1720 = vrot.slane %v1690, 6
        %v1721 = vrot.slane %v1691, 6
        %v1722 = vsel %vm732, %v1720, %v1721
        %v1723 = vrot.slane %v1692, 6
        %v1724 = vsel %vm732, %v1721, %v1723
        %v1727 = vadd.f32 %v1718, %v1722
        %v1728 = vadd.f32 %v1719, %v1724
        %v1729 = vrot.slane %v1675, 7
        %v1730 = vrot.slane %v1676, 7
        %v1731 = vsel %vm742, %v1729, %v1730
        %v1732 = vrot.slane %v1677, 7
        %v1733 = vsel %vm742, %v1730, %v1732
        %v1736 = vadd.f32 %v1727, %v1731
        %v1737 = vadd.f32 %v1728, %v1733
        %v1738 = vadd.f32 %v1736, %v1661
        %v1739 = vadd.f32 %v1737, %v1662
        %v1740 = vmul.f32 %v1642, 0.0075987587
        %v1742 = vrot.slane %v1740, 1
        %v1743 = vsel %vm658, %v1654, %v1742
        %v1745 = vadd.f32 %v1738, %v1655
        %v1746 = vadd.f32 %v1739, %v1743
        %v1747 = vmul.f32 %v1641, 0.0010283802
        %v1748 = vmul.f32 %v1642, 0.0010283802
        %v1752 = vrot.slane %v1644, 2
        %v1753 = vrot.slane %v1747, 2
        %v1754 = vsel %vm674, %v1752, %v1753
        %v1755 = vrot.slane %v1748, 2
        %v1756 = vsel %vm674, %v1753, %v1755
        %v1759 = vadd.f32 %v1745, %v1754
        %v1760 = vadd.f32 %v1746, %v1756
        %v1761 = vmul.f32 %v434, %v438
        %v1762 = vmul.f32 %v435, %v439
        %v1763 = vmul.f32 %v436, %v440
        %v1764 = vmul.f32 %v437, %v441
        %v1765 = vmul.f32 %v1761, 0.0010283802
        %v1766 = vmul.f32 %v1762, 0.0010283802
        %v1767 = vmul.f32 %v1763, 0.0010283802
        %v1768 = vmul.f32 %v1764, 0.0010283802
        %v1769 = vmul.f32 %v1761, 0.0075987587
        %v1770 = vmul.f32 %v1762, 0.0075987587
        %v1771 = vmul.f32 %v1763, 0.0075987587
        %v1772 = vmul.f32 %v1764, 0.0075987587
        %1777 = vrot.lane.b32.xlu0 %v1769, 127
        %v1778 = vpop.permute.xlu0 %1777
        %1779 = vrot.lane.b32.xlu0 %v1770, 127
        %v1780 = vpop.permute.xlu0 %1779
        %1781 = vrot.lane.b32.xlu0 %v1771, 127
        %v1782 = vpop.permute.xlu0 %1781
        %1783 = vrot.lane.b32.xlu0 %v1772, 127
        %v1784 = vpop.permute.xlu0 %1783
        %v1789 = vadd.f32 %v1765, %v1778
        %v1790 = vadd.f32 %v1766, %v1780
        %v1791 = vadd.f32 %v1767, %v1782
        %v1792 = vadd.f32 %v1768, %v1784
        %v1793 = vmul.f32 %v1761, 0.036000773
        %v1794 = vmul.f32 %v1762, 0.036000773
        %v1795 = vmul.f32 %v1763, 0.036000773
        %v1796 = vmul.f32 %v1764, 0.036000773
        %1801 = vrot.lane.b32.xlu0 %v1793, 126
        %v1802 = vpop.permute.xlu0 %1801
        %1803 = vrot.lane.b32.xlu0 %v1794, 126
        %v1804 = vpop.permute.xlu0 %1803
        %1805 = vrot.lane.b32.xlu0 %v1795, 126
        %v1806 = vpop.permute.xlu0 %1805
        %1807 = vrot.lane.b32.xlu0 %v1796, 126
        %v1808 = vpop.permute.xlu0 %1807
        %v1813 = vadd.f32 %v1789, %v1802
        %v1814 = vadd.f32 %v1790, %v1804
        %v1815 = vadd.f32 %v1791, %v1806
        %v1816 = vadd.f32 %v1792, %v1808
        %v1817 = vmul.f32 %v1761, 0.109360695
        %v1818 = vmul.f32 %v1762, 0.109360695
        %v1819 = vmul.f32 %v1763, 0.109360695
        %v1820 = vmul.f32 %v1764, 0.109360695
        %1825 = vrot.lane.b32.xlu0 %v1817, 125
        %v1826 = vpop.permute.xlu0 %1825
        %1827 = vrot.lane.b32.xlu0 %v1818, 125
        %v1828 = vpop.permute.xlu0 %1827
        %1829 = vrot.lane.b32.xlu0 %v1819, 125
        %v1830 = vpop.permute.xlu0 %1829
        %1831 = vrot.lane.b32.xlu0 %v1820, 125
        %v1832 = vpop.permute.xlu0 %1831
        %v1837 = vadd.f32 %v1813, %v1826
        %v1838 = vadd.f32 %v1814, %v1828
        %v1839 = vadd.f32 %v1815, %v1830
        %v1840 = vadd.f32 %v1816, %v1832
        %v1841 = vmul.f32 %v1761, 0.21300554
        %v1842 = vmul.f32 %v1762, 0.21300554
        %v1843 = vmul.f32 %v1763, 0.21300554
        %v1844 = vmul.f32 %v1764, 0.21300554
        %1849 = vrot.lane.b32.xlu0 %v1841, 124
        %v1850 = vpop.permute.xlu0 %1849
        %1851 = vrot.lane.b32.xlu0 %v1842, 124
        %v1852 = vpop.permute.xlu0 %1851
        %1853 = vrot.lane.b32.xlu0 %v1843, 124
        %v1854 = vpop.permute.xlu0 %1853
        %1855 = vrot.lane.b32.xlu0 %v1844, 124
        %v1856 = vpop.permute.xlu0 %1855
        %v1861 = vadd.f32 %v1837, %v1850
        %v1862 = vadd.f32 %v1838, %v1852
        %v1863 = vadd.f32 %v1839, %v1854
        %v1864 = vadd.f32 %v1840, %v1856
        %v1865 = vmul.f32 %v1761, 0.26601174
        %v1866 = vmul.f32 %v1762, 0.26601174
        %v1867 = vmul.f32 %v1763, 0.26601174
        %v1868 = vmul.f32 %v1764, 0.26601174
        %1873 = vrot.lane.b32.xlu0 %v1865, 123
        %v1874 = vpop.permute.xlu0 %1873
        %1875 = vrot.lane.b32.xlu0 %v1866, 123
        %v1876 = vpop.permute.xlu0 %1875
        %1877 = vrot.lane.b32.xlu0 %v1867, 123
        %v1878 = vpop.permute.xlu0 %1877
        %1879 = vrot.lane.b32.xlu0 %v1868, 123
        %v1880 = vpop.permute.xlu0 %1879
        %v1885 = vadd.f32 %v1861, %v1874
        %v1886 = vadd.f32 %v1862, %v1876
        %v1887 = vadd.f32 %v1863, %v1878
        %v1888 = vadd.f32 %v1864, %v1880
        %1889 = vrot.lane.b32.xlu0 %v1841, 122
        %v1890 = vpop.permute.xlu0 %1889
        %1891 = vrot.lane.b32.xlu0 %v1842, 122
        %v1892 = vpop.permute.xlu0 %1891
        %1893 = vrot.lane.b32.xlu0 %v1843, 122
        %v1894 = vpop.permute.xlu0 %1893
        %1895 = vrot.lane.b32.xlu0 %v1844, 122
        %v1896 = vpop.permute.xlu0 %1895
        %v1901 = vadd.f32 %v1885, %v1890
        %v1902 = vadd.f32 %v1886, %v1892
        %v1903 = vadd.f32 %v1887, %v1894
        %v1904 = vadd.f32 %v1888, %v1896
        %1905 = vrot.lane.b32.xlu0 %v1817, 121
        %v1906 = vpop.permute.xlu0 %1905
        %1907 = vrot.lane.b32.xlu0 %v1818, 121
        %v1908 = vpop.permute.xlu0 %1907
        %1909 = vrot.lane.b32.xlu0 %v1819, 121
        %v1910 = vpop.permute.xlu0 %1909
        %1911 = vrot.lane.b32.xlu0 %v1820, 121
        %v1912 = vpop.permute.xlu0 %1911
        %v1917 = vadd.f32 %v1901, %v1906
        %v1918 = vadd.f32 %v1902, %v1908
        %v1919 = vadd.f32 %v1903, %v1910
        %v1920 = vadd.f32 %v1904, %v1912
        %1921 = vrot.lane.b32.xlu0 %v1793, 120
        %v1922 = vpop.permute.xlu0 %1921
        %1923 = vrot.lane.b32.xlu0 %v1794, 120
        %v1924 = vpop.permute.xlu0 %1923
        %1925 = vrot.lane.b32.xlu0 %v1795, 120
        %v1926 = vpop.permute.xlu0 %1925
        %1927 = vrot.lane.b32.xlu0 %v1796, 120
        %v1928 = vpop.permute.xlu0 %1927
        %v1933 = vadd.f32 %v1917, %v1922
        %v1934 = vadd.f32 %v1918, %v1924
        %v1935 = vadd.f32 %v1919, %v1926
        %v1936 = vadd.f32 %v1920, %v1928
        %1937 = vrot.lane.b32.xlu0 %v1769, 119
        %v1938 = vpop.permute.xlu0 %1937
        %1939 = vrot.lane.b32.xlu0 %v1770, 119
        %v1940 = vpop.permute.xlu0 %1939
        %1941 = vrot.lane.b32.xlu0 %v1771, 119
        %v1942 = vpop.permute.xlu0 %1941
        %1943 = vrot.lane.b32.xlu0 %v1772, 119
        %v1944 = vpop.permute.xlu0 %1943
        %v1949 = vadd.f32 %v1933, %v1938
        %v1950 = vadd.f32 %v1934, %v1940
        %v1951 = vadd.f32 %v1935, %v1942
        %v1952 = vadd.f32 %v1936, %v1944
        %1957 = vrot.lane.b32.xlu0 %v1765, 118
        %v1958 = vpop.permute.xlu0 %1957
        %1959 = vrot.lane.b32.xlu0 %v1766, 118
        %v1960 = vpop.permute.xlu0 %1959
        %1961 = vrot.lane.b32.xlu0 %v1767, 118
        %v1962 = vpop.permute.xlu0 %1961
        %1963 = vrot.lane.b32.xlu0 %v1768, 118
        %v1964 = vpop.permute.xlu0 %1963
        %v1969 = vadd.f32 %v1949, %v1958
        %v1970 = vadd.f32 %v1950, %v1960
        %v1971 = vadd.f32 %v1951, %v1962
        %v1972 = vadd.f32 %v1952, %v1964
        %v1973 = vmul.f32 %v1969, 0.0010283802
        %v1974 = vmul.f32 %v1970, 0.0010283802
        %v1975 = vmul.f32 %v1969, 0.0075987587
        %v1976 = vmul.f32 %v1970, 0.0075987587
        %v1977 = vmul.f32 %v1971, 0.0075987587
        %v1981 = vrot.slane %v1975, 1
        %v1982 = vrot.slane %v1976, 1
        %v1983 = vsel %vm658, %v1981, %v1982
        %v1984 = vrot.slane %v1977, 1
        %v1985 = vsel %vm658, %v1982, %v1984
        %v1988 = vadd.f32 %v1973, %v1983
        %v1989 = vadd.f32 %v1974, %v1985
        %v1990 = vmul.f32 %v1969, 0.036000773
        %v1991 = vmul.f32 %v1970, 0.036000773
        %v1992 = vmul.f32 %v1971, 0.036000773
        %v1996 = vrot.slane %v1990, 2
        %v1997 = vrot.slane %v1991, 2
        %v1998 = vsel %vm674, %v1996, %v1997
        %v1999 = vrot.slane %v1992, 2
        %v2000 = vsel %vm674, %v1997, %v1999
        %v2003 = vadd.f32 %v1988, %v1998
        %v2004 = vadd.f32 %v1989, %v2000
        %v2005 = vmul.f32 %v1969, 0.109360695
        %v2006 = vmul.f32 %v1970, 0.109360695
        %v2007 = vmul.f32 %v1971, 0.109360695
        %v2011 = vrot.slane %v2005, 3
        %v2012 = vrot.slane %v2006, 3
        %v2013 = vsel %vm690, %v2011, %v2012
        %v2014 = vrot.slane %v2007, 3
        %v2015 = vsel %vm690, %v2012, %v2014
        %v2018 = vadd.f32 %v2003, %v2013
        %v2019 = vadd.f32 %v2004, %v2015
        %v2020 = vmul.f32 %v1969, 0.21300554
        %v2021 = vmul.f32 %v1970, 0.21300554
        %v2022 = vmul.f32 %v1971, 0.21300554
        %v2026 = vrot.slane %v2020, 4
        %v2027 = vrot.slane %v2021, 4
        %v2028 = vsel %vm706, %v2026, %v2027
        %v2029 = vrot.slane %v2022, 4
        %v2030 = vsel %vm706, %v2027, %v2029
        %v2033 = vadd.f32 %v2018, %v2028
        %v2034 = vadd.f32 %v2019, %v2030
        %v2035 = vmul.f32 %v1969, 0.26601174
        %v2036 = vmul.f32 %v1970, 0.26601174
        %v2037 = vmul.f32 %v1971, 0.26601174
        %v2041 = vrot.slane %v2035, 5
        %v2042 = vrot.slane %v2036, 5
        %v2043 = vsel %vm722, %v2041, %v2042
        %v2044 = vrot.slane %v2037, 5
        %v2045 = vsel %vm722, %v2042, %v2044
        %v2048 = vadd.f32 %v2033, %v2043
        %v2049 = vadd.f32 %v2034, %v2045
        %v2050 = vrot.slane %v2020, 6
        %v2051 = vrot.slane %v2021, 6
        %v2052 = vsel %vm732, %v2050, %v2051
        %v2053 = vrot.slane %v2022, 6
        %v2054 = vsel %vm732, %v2051, %v2053
        %v2057 = vadd.f32 %v2048, %v2052
        %v2058 = vadd.f32 %v2049, %v2054
        %v2059 = vrot.slane %v2005, 7
        %v2060 = vrot.slane %v2006, 7
        %v2061 = vsel %vm742, %v2059, %v2060
        %v2062 = vrot.slane %v2007, 7
        %v2063 = vsel %vm742, %v2060, %v2062
        %v2066 = vadd.f32 %v2057, %v2061
        %v2067 = vadd.f32 %v2058, %v2063
        %v2068 = vadd.f32 %v2066, %v1991
        %v2069 = vadd.f32 %v2067, %v1992
        %v2070 = vmul.f32 %v1972, 0.0075987587
        %v2072 = vrot.slane %v2070, 1
        %v2073 = vsel %vm658, %v1984, %v2072
        %v2075 = vadd.f32 %v2068, %v1985
        %v2076 = vadd.f32 %v2069, %v2073
        %v2077 = vmul.f32 %v1971, 0.0010283802
        %v2078 = vmul.f32 %v1972, 0.0010283802
        %v2082 = vrot.slane %v1974, 2
        %v2083 = vrot.slane %v2077, 2
        %v2084 = vsel %vm674, %v2082, %v2083
        %v2085 = vrot.slane %v2078, 2
        %v2086 = vsel %vm674, %v2083, %v2085
        %v2089 = vadd.f32 %v2075, %v2084
        %v2090 = vadd.f32 %v2076, %v2086
        %v2091 = vmul.f32 %v773, %v773
        %v2092 = vmul.f32 %v774, %v774
        %v2093 = vmul.f32 %v1099, %v1099
        %v2094 = vmul.f32 %v1100, %v1100
        %v2095 = vmul.f32 %v773, %v1099
        %v2096 = vmul.f32 %v774, %v1100
        %v2097 = vsub.f32 %v1429, %v2091
        %v2098 = vsub.f32 %v1430, %v2092
        %v2099 = vsub.f32 %v1759, %v2093
        %v2100 = vsub.f32 %v1760, %v2094
        %v2101 = vsub.f32 %v2089, %v2095
        %v2102 = vsub.f32 %v2090, %v2096
        %s2103 = sld [smem:[#allocation3]]
        %s2104 = sld [smem:[#allocation3 + $0x1]]
        %v2105 = vmul.f32 %v2101, 2.0
        %v2106 = vmul.f32 %v2102, 2.0
        %v2107 = vstv %s2104
        %v2108 = vadd.f32 %v2105, %v2107
        %v2109 = vadd.f32 %v2106, %v2107
        %v2110 = vadd.f32 %v2097, %v2099
        %v2111 = vadd.f32 %v2098, %v2100
        %v2112 = vadd.f32 %v2110, %v2107
        %v2113 = vadd.f32 %v2111, %v2107
        %v2114 = vmul.f32 %v2095, 2.0
        %v2115 = vmul.f32 %v2096, 2.0
        %v2116 = vstv %s2103
        %v2117 = vadd.f32 %v2114, %v2116
        %v2118 = vadd.f32 %v2115, %v2116
        %v2119 = vmul.f32 %v2117, %v2108
        %v2120 = vmul.f32 %v2118, %v2109
        %v2121 = vadd.f32 %v2091, %v2093
        %v2122 = vadd.f32 %v2092, %v2094
        %v2123 = vadd.f32 %v2121, %v2116
        %v2124 = vadd.f32 %v2122, %v2116
        %v2125 = vmul.f32 %v2123, %v2112
        %v2126 = vmul.f32 %v2124, %v2113
        %v2127 = vrcp.pop %v2125
        %v2128 = vmul.f32 %v2119, %v2127
        %v2129 = vrcp.pop %v2126
        %v2130 = vmul.f32 %v2120, %v2129
        %v2131 = vlaneseq
        %v2132 = vshrl.u32 %v2131, 7
        %v2133 = vadd.s32 %v2132, 8
        %s2134 = smul.u32 %s34, 16
        %v2135 = vstv %s2134
        %v2136 = vadd.s32 %v2132, %v2135
        %v2137 = vadd.s32 %v2133, %v2135
        %vm2138 = vcmp.lt.s32.totalorder %v2136, 22
        %vm2139 = vcmp.lt.s32.totalorder %v2137, 22
        %s2140 = sld [smem:[#allocation2]]
        %v2141 = vsel %vm2138, %v2128, 0.0
        %v2142 = vsel %vm2139, %v2130, 0.0
        %vm2143 = vcmask 179200
        %v2144 = vsel %vm2143, %v2141, 0.0
        %v2145 = vsel %vm2143, %v2142, 0.0
        %v2146 = vadd.f32 %v2144, %v2145
        %2147 = vadd.xlane.f32.xlu0 %v2146
        %v2148 = vpop.xlane.xlu0 %2147
        %v2149 = vrot.slane %v2148, 4
        %v2150 = vadd.f32 %v2148, %v2149
        %v2151 = vrot.slane %v2150, 2
        %v2152 = vadd.f32 %v2150, %v2151
        %v2153 = vrot.slane %v2152, 1
        %v2154 = vadd.f32 %v2152, %v2153
        %s2155 = vtos %v2154
        %s2156 = sadd.f32 %s2140, %s2155
        %s2157 = scalar_lea.smem [#allocation2], 0
        %2158 = sst [smem:[%s2157]] %s2156
        %p2159 = scmp.eq.s32.totalorder %s34, 1
        // Predicated region
        $region65: #{tpu_custom_call.1} parent=39 // pred_check
          %p2160 = pneg %p2159
        $region66: #{tpu_custom_call.1} parent=39 // pred_check_branch
          %2162 = sbr.rel (%p2160) target = $region68
        $region67: #{tpu_custom_call.1} parent=39 // pred_region
          %s2163 = sld [smem:[#allocation2]]
          %v2164 = vstv %s2163
          %2165 = vst [vmem:[%s417] sm:$0xff] %v2164
        $region68: #{tpu_custom_call.1} parent=39 // pred_fallthru
          _
        %s2166 = sand.u32 %s194, 1
        %s2167 = scalar_lea.sflag [#allocation5], %s2166
        %s2168 = sand.u32 %s194, 1
        %s2169 = smul.addr %s2168, 8
        %s2170 = scalar_lea.vmem [#allocation13], %s2169
        // Predicated region
        $region69: #{tpu_custom_call.1} parent=39 // pred_check
          %p2171 = pneg %p204
        $region70: #{tpu_custom_call.1} parent=39 // pred_check_branch
          %2173 = sbr.rel (%p2171) target = $region72
        $region71: #{tpu_custom_call.1} parent=39 // pred_region
          %s2175 = ssub.s32 128, 128
          %2176 = vsyncadd %s2167, %s2175
          %s2177 = smul.addr %s33, 128
          %s2178 = scalar_lea.hbm %s5, %s2177
          %s2180 = sshll.u32 %s2170, 4
          %s2181 = int_to_ptr.vmem [resolvable:$true] %s2180
          %2183 = dma.vmem_to_hbm [thread:$0]  %s2181, 128, %s2178, %s2167
        $region72: #{tpu_custom_call.1} parent=39 // pred_fallthru
          _
      $region40: #{tpu_custom_call.1} parent=5 // pred_fallthru
        _
      %p2184 = scmp.le.s32.totalorder 2, %s24
      // Predicated region
      $region73: #{tpu_custom_call.1} parent=5 // pred_check
        %p2185 = pneg %p2184
      $region74: #{tpu_custom_call.1} parent=5 // pred_check_branch
        %2187 = sbr.rel (%p2185) target = $region76
      $region75: #{tpu_custom_call.1} parent=5 // pred_region
        %s2188 = ssub.s32 %s24, 2
        // Predicated region
        $region77: #{tpu_custom_call.1} parent=75 // pred_check
          %p2189 = pneg %p210
        $region78: #{tpu_custom_call.1} parent=75 // pred_check_branch
          %2191 = sbr.rel (%p2189) target = $region80
        $region79: #{tpu_custom_call.1} parent=75 // pred_region
          %s2192 = sand.u32 %s195, 1
          %s2193 = scalar_lea.sflag [#allocation5], %s2192
          %s2194 = sand.u32 %s195, 1
          %s2195 = smul.addr %s2194, 8
          %s2196 = scalar_lea.vmem [#allocation13], %s2195
          %2197 = dma.done %s2193, 128
        $region80: #{tpu_custom_call.1} parent=75 // pred_fallthru
          _
      $region76: #{tpu_custom_call.1} parent=5 // pred_fallthru
        _
    $region6: #{tpu_custom_call.1} parent=1 // loop_footer
      %s28 = sadd.s32 1, %s24
    $region7: #{tpu_custom_call.1} parent=1 // loop_footer_branch
      %23 = sbr.rel target = $region3
    $region8: #{tpu_custom_call.1} parent=1 // loop_exit
      _
    %2198 = vsyncpa [#allocation4], 1
    %s2199 = scalar_lea.sflag [#allocation4], 1
    %2200 = vsyncpa %s2199, 1
    %2201 = vsyncpa [#allocation9], 1
    %s2202 = scalar_lea.sflag [#allocation9], 1
    %2203 = vsyncpa %s2202, 1
    %2204 = vsyncpa [#allocation12], 1
    %s2205 = scalar_lea.sflag [#allocation12], 1
    %2206 = vsyncpa %s2205, 1
    %2207 = vsyncpa [#allocation5], 1
    %s2208 = scalar_lea.sflag [#allocation5], 1
    %2209 = vsyncpa %s2208, 1
    %2210 = vsyncpa [#allocation6], 1
    %s2211 = scalar_lea.sflag [#allocation6], 1
    %2212 = vsyncpa %s2211, 1

</llo_original>
